<compile_context>
chip_gen: v7x
topology: tpu7x:2x2x1
jax: 0.10.0
libtpu: 0.0.40
codegen_flags: <defaults>
</compile_context>

<pallas_src>
import jax
import jax.numpy as jnp
from jax.experimental import pallas as pl
from jax.experimental.pallas import tpu as pltpu


# --------------------------- fully fused forward kernel ----------------------
# ONE grid-less pallas_call for the whole forward pass:
#   * both LSTM layers with the time recurrence fully unrolled in-kernel,
#   * the FC head on output[:, -1, :] fused in (done on VPU/XLU, no MXU N=1 matmul),
#   * all activations / h / c / projections stay in VMEM; only the final (L,1)
#     prediction and (n_layers, B, H) hidden states go back to HBM.
#
# Perf-review changes incorporated:
#   * gates are column-reordered offline to [i, f, o, g] so each step does ONE
#     sigmoid pass over 3H lanes + ONE tanh pass over H lanes instead of two
#     full-(B,4H) transcendental passes (cuts one serial EUP pass per step),
#   * the NEXT layer's input projection is issued incrementally right after h_t
#     is produced (hides under the current layer's EUP/VPU latency, so the big
#     inter-layer matmul disappears from the critical path),
#   * Python-list concats replaced by a reshape + VMEM scratch slabs
#     (scratch_shapes) -> bounded vreg pressure, plain aligned stores,
#   * matmul operands pre-cast to bf16 (weights offline, h at the dot); all
#     VPU/EUP/cell-state math stays f32 (v5e has no bf16 VPU/EUP),
#   * FC head = vreg multiply + lane reduce (XLU) instead of a (L,32)@(32,1) MXU op,
#   * kept grid-less single-TensorCore launch (everything < 100 KB VMEM).
# Explicit weight-stationary MXU driving (pltpu.matmul_push_rhs/...) was
# considered but left out for portability/robustness; jnp.dot lowers to the
# standard bf16 MXU path on v5e/v6e/v7x.
def _make_fused_kernel(n_layers, seq_len, batch, hidden):
    L, B, H = seq_len, batch, hidden

    def kernel(*refs):
        x_ref = refs[0]
        fcw_ref = refs[1 + 3 * n_layers]          # (1, H)  f32
        fcb_ref = refs[2 + 3 * n_layers]          # (1, 1)  f32
        out_ref = refs[3 + 3 * n_layers]          # (L, 1)  f32
        hn_ref = refs[4 + 3 * n_layers]           # (n_layers, B, H) f32
        proj_a = refs[5 + 3 * n_layers]           # (L*B, 4H) f32 scratch
        proj_b = refs[6 + 3 * n_layers]           # (L*B, 4H) f32 scratch
        top = refs[7 + 3 * n_layers]              # (L, H)   f32 scratch
        proj_scr = (proj_a, proj_b)

        # Layer-0 input projection for ALL time steps in one MXU pass (hoisted
        # off the recurrence), bias folded in once.  B == 8 matches the sublane
        # tile so the reshape is layout-free.
        wih0 = refs[1][...]                       # (F, 4H) bf16, cols [i,f,o,g]
        bias0 = refs[3][...]                      # (1, 4H) f32
        x_flat = x_ref[...].reshape(L * B, x_ref.shape[-1]).astype(jnp.bfloat16)
        proj_a[...] = jnp.dot(x_flat, wih0,
                              preferred_element_type=jnp.float32) + bias0

        for l in range(n_layers):
            whh = refs[2 + 3 * l][...]            # (H, 4H) bf16, cols [i,f,o,g]
            src = proj_scr[l % 2]                 # this layer's precomputed proj
            dst = proj_scr[(l + 1) % 2]           # next layer's proj (built here)
            last_layer = (l == n_layers - 1)
            if not last_layer:
                wih_n = refs[1 + 3 * (l + 1)][...]   # (H, 4H) bf16
                bias_n = refs[3 + 3 * (l + 1)][...]  # (1, 4H) f32

            h = jnp.zeros((B, H), jnp.float32)    # h_0 = 0 (matches the module)
            c = jnp.zeros((B, H), jnp.float32)    # c_0 = 0
            for t in range(L):                    # fully unrolled recurrence
                gates = src[t * B:(t + 1) * B, :] + jnp.dot(
                    h.astype(jnp.bfloat16), whh,
                    preferred_element_type=jnp.float32)        # (B, 4H) f32
                # Gate order is [i, f, o, g]: one sigmoid pass over 3H lanes,
                # one tanh pass over H lanes (no redundant full-4H passes).
                sg = jax.nn.sigmoid(gates[:, :3 * H])
                g_g = jnp.tanh(gates[:, 3 * H:])
                i_g = sg[:, 0:H]
                f_g = sg[:, H:2 * H]
                o_g = sg[:, 2 * H:3 * H]
                c = f_g * c + i_g * g_g
                h = o_g * jnp.tanh(c)
                if not last_layer:
                    # Next layer's input projection, issued per step so the MXU
                    # work hides under this layer's EUP/VPU latency.
                    dst[t * B:(t + 1) * B, :] = jnp.dot(
                        h.astype(jnp.bfloat16), wih_n,
                        preferred_element_type=jnp.float32) + bias_n
                else:
                    # fc(output[:, -1, :]) — the PyTorch code indexes the LAST
                    # BATCH element (not the last time step); reproduce exactly.
                    top[t:t + 1, :] = h[B - 1:B, :]

            hn_ref[l] = h                         # final hidden state of layer l
            # TODO(synk): inter-layer dropout (p=0.15) is train-mode only;
            # eval-mode (identity) semantics are implemented here.

        # FC head on VPU/XLU: broadcast multiply + lane reduce (no MXU N=1 matmul).
        out_ref[...] = (jnp.sum(top[...] * fcw_ref[...], axis=-1, keepdims=True)
                        + fcb_ref[...])

    return kernel


def _fused_forward(x, prepared):
    L, B, _ = x.shape
    lstm = prepared["lstm"]
    n_layers = len(lstm)
    H = lstm[0][1].shape[0]                       # whh_t: (H, 4H)

    flat_w = []
    for (wih_t, whh_t, bias) in lstm:
        flat_w += [wih_t, whh_t, bias]
    inputs = (x, *flat_w, prepared["fc_w_row"], prepared["fc_b"])

    # No grid: single invocation, whole (tiny) arrays resident in VMEM.
    # At B=8 / H=32 a second TensorCore split (v7x) would only add overhead;
    # if batch grows, add a leading "parallel" grid axis over B.
    vmem = pl.BlockSpec(memory_space=pltpu.MemorySpace.VMEM)
    out, hn = pl.pallas_call(
        _make_fused_kernel(n_layers, L, B, H),
        out_shape=(jax.ShapeDtypeStruct((L, 1), jnp.float32),
                   jax.ShapeDtypeStruct((n_layers, B, H), jnp.float32)),
        in_specs=[vmem] * len(inputs),
        out_specs=(vmem, vmem),
        scratch_shapes=[pltpu.VMEM((L * B, 4 * H), jnp.float32),   # proj (even layers)
                        pltpu.VMEM((L * B, 4 * H), jnp.float32),   # proj (odd layers)
                        pltpu.VMEM((L, H), jnp.float32)],          # top rows for FC
    )(*inputs)
    return out, hn


my_lstm_forward = jax.jit(_fused_forward)


# ------------------------------ parameter handling ----------------------------
def init_params(key, input_feature_size, hidden_size, n_layers):
    """PyTorch-layout params, uniform(-1/sqrt(H), 1/sqrt(H)) init (nn.LSTM / nn.Linear)."""
    k = 1.0 / jnp.sqrt(jnp.float32(hidden_size))
    lstm_params = []
    for l in range(n_layers):
        in_f = input_feature_size if l == 0 else hidden_size
        key, k1, k2, k3, k4 = jax.random.split(key, 5)
        w_ih = jax.random.uniform(k1, (4 * hidden_size, in_f), jnp.float32, -k, k)
        w_hh = jax.random.uniform(k2, (4 * hidden_size, hidden_size), jnp.float32, -k, k)
        b_ih = jax.random.uniform(k3, (4 * hidden_size,), jnp.float32, -k, k)
        b_hh = jax.random.uniform(k4, (4 * hidden_size,), jnp.float32, -k, k)
        lstm_params.append((w_ih, w_hh, b_ih, b_hh))
    key, k5, k6 = jax.random.split(key, 3)
    fc_w = jax.random.uniform(k5, (1, hidden_size), jnp.float32, -k, k)
    fc_b = jax.random.uniform(k6, (1,), jnp.float32, -k, k)
    return {"lstm": lstm_params, "fc_w": fc_w, "fc_b": fc_b}


def _reorder_ifog(w, hidden_size, axis=-1):
    """Permute gate blocks from PyTorch's [i, f, g, o] to [i, f, o, g]."""
    i, f, g, o = jnp.split(w, 4, axis=axis)
    return jnp.concatenate([i, f, o, g], axis=axis)


def prepare_params(params):
    """One-time layout prep (do NOT redo per forward call):
    transpose weights, reorder gate columns to [i,f,o,g], pre-add the two bias
    vectors, pre-cast matmul weights to bf16, and lay fc_w out as a row."""
    H = params["lstm"][0][1].shape[1]             # w_hh: (4H, H)
    lstm = []
    for (w_ih, w_hh, b_ih, b_hh) in params["lstm"]:
        wih_t = _reorder_ifog(jnp.transpose(w_ih), H)            # (F_in, 4H)
        whh_t = _reorder_ifog(jnp.transpose(w_hh), H)            # (H,   4H)
        bias = _reorder_ifog((b_ih + b_hh).reshape(1, -1), H)    # (1,   4H)
        lstm.append((wih_t.astype(jnp.bfloat16),
                     whh_t.astype(jnp.bfloat16),
                     bias.astype(jnp.float32)))
    return {"lstm": lstm,
            "fc_w_row": params["fc_w"].reshape(1, -1).astype(jnp.float32),  # (1, H)
            "fc_b": params["fc_b"].reshape(1, 1).astype(jnp.float32)}       # (1, 1)


if __name__ == "__main__":
    # Small shapes consistent with the module: batch == time_steps.
    INPUT_F = 8        # input_feature_size
    TIME_STEPS = 8     # acts as the batch dimension in this module
    HIDDEN = 32        # hidden_size
    N_LAYERS = 2
    SEQ_LEN = 6        # sequence length of x

    key = jax.random.PRNGKey(0)
    key, kp, kx = jax.random.split(key, 3)
    raw_params = init_params(kp, INPUT_F, HIDDEN, N_LAYERS)
    prepared = prepare_params(raw_params)          # done once, outside jit
    x = jax.random.normal(kx, (SEQ_LEN, TIME_STEPS, INPUT_F), dtype=jnp.float32)

    out, hn = my_lstm_forward(x, prepared)
    jax.block_until_ready((out, hn))

    assert out.shape == (SEQ_LEN, 1), out.shape
    assert hn.shape == (N_LAYERS, TIME_STEPS, HIDDEN), hn.shape
    print("KERNEL_OK")
</pallas_src>

<mosaic_0001>
module attributes {stable_mosaic.version = 11 : i64} {
  func.func @kernel(%arg0: memref<6x8x8xf32, #tpu.memory_space<vmem>>, %arg1: memref<8x128xbf16, #tpu.memory_space<vmem>>, %arg2: memref<32x128xbf16, #tpu.memory_space<vmem>>, %arg3: memref<1x128xf32, #tpu.memory_space<vmem>>, %arg4: memref<32x128xbf16, #tpu.memory_space<vmem>>, %arg5: memref<32x128xbf16, #tpu.memory_space<vmem>>, %arg6: memref<1x128xf32, #tpu.memory_space<vmem>>, %arg7: memref<1x32xf32, #tpu.memory_space<vmem>>, %arg8: memref<1x1xf32, #tpu.memory_space<vmem>>, %arg9: memref<6x1xf32, #tpu.memory_space<vmem>>, %arg10: memref<2x8x32xf32, #tpu.memory_space<vmem>>, %arg11: memref<48x128xf32, #tpu.memory_space<vmem>>, %arg12: memref<48x128xf32, #tpu.memory_space<vmem>>, %arg13: memref<6x32xf32, #tpu.memory_space<vmem>>) attributes {dimension_semantics = [], scalar_prefetch = 0 : i64, scratch_operands = 3 : i64, tpu.core_type = #tpu.core_type<tc>} {
    %c0 = arith.constant 0 : index
    %c0_0 = arith.constant 0 : index
    %0 = vector.load %arg1[%c0, %c0_0] : memref<8x128xbf16, #tpu.memory_space<vmem>>, vector<8x128xbf16>
    %c0_1 = arith.constant 0 : index
    %c0_2 = arith.constant 0 : index
    %1 = vector.load %arg3[%c0_1, %c0_2] : memref<1x128xf32, #tpu.memory_space<vmem>>, vector<1x128xf32>
    %c0_3 = arith.constant 0 : index
    %c0_4 = arith.constant 0 : index
    %c0_5 = arith.constant 0 : index
    %2 = vector.load %arg0[%c0_3, %c0_4, %c0_5] : memref<6x8x8xf32, #tpu.memory_space<vmem>>, vector<6x8x8xf32>
    %3 = vector.shape_cast %2 : vector<6x8x8xf32> to vector<48x8xf32>
    %4 = arith.truncf %3 : vector<48x8xf32> to vector<48x8xbf16>
    %cst = arith.constant dense<0.000000e+00> : vector<48x128xf32>
    %5 = tpu.matmul %4, %0, %cst {dimension_numbers = #tpu.dot_dimension_numbers<[1], [0], [0], [1], [0, 0, 1, 1], [], []>} : vector<48x8xbf16>, vector<8x128xbf16>, vector<48x128xf32> -> vector<48x128xf32>
    %6 = vector.broadcast %1 : vector<1x128xf32> to vector<48x128xf32>
    %7 = arith.addf %5, %6 : vector<48x128xf32>
    %c0_6 = arith.constant 0 : index
    %c0_7 = arith.constant 0 : index
    %8 = vector.load %arg11[%c0_6, %c0_7] : memref<48x128xf32, #tpu.memory_space<vmem>>, vector<48x128xf32>
    tpu.vector_store %arg11[%c0_6, %c0_7], %7 {strides = array<i32>} : memref<48x128xf32, #tpu.memory_space<vmem>>, vector<48x128xf32>,
    %c0_8 = arith.constant 0 : index
    %c0_9 = arith.constant 0 : index
    %9 = vector.load %arg2[%c0_8, %c0_9] : memref<32x128xbf16, #tpu.memory_space<vmem>>, vector<32x128xbf16>
    %c0_10 = arith.constant 0 : index
    %c0_11 = arith.constant 0 : index
    %10 = vector.load %arg4[%c0_10, %c0_11] : memref<32x128xbf16, #tpu.memory_space<vmem>>, vector<32x128xbf16>
    %c0_12 = arith.constant 0 : index
    %c0_13 = arith.constant 0 : index
    %11 = vector.load %arg6[%c0_12, %c0_13] : memref<1x128xf32, #tpu.memory_space<vmem>>, vector<1x128xf32>
    %cst_14 = arith.constant 0.000000e+00 : f32
    %12 = vector.broadcast %cst_14 : f32 to vector<8x32xf32>
    %cst_15 = arith.constant 0.000000e+00 : f32
    %13 = vector.broadcast %cst_15 : f32 to vector<8x32xf32>
    %c0_16 = arith.constant 0 : index
    %c0_17 = arith.constant 0 : index
    %14 = vector.load %arg11[%c0_16, %c0_17] : memref<48x128xf32, #tpu.memory_space<vmem>>, vector<8x128xf32>
    %15 = arith.truncf %12 : vector<8x32xf32> to vector<8x32xbf16>
    %cst_18 = arith.constant dense<0.000000e+00> : vector<8x128xf32>
    %16 = tpu.matmul %15, %9, %cst_18 {dimension_numbers = #tpu.dot_dimension_numbers<[1], [0], [0], [1], [0, 0, 1, 1], [], []>} : vector<8x32xbf16>, vector<32x128xbf16>, vector<8x128xf32> -> vector<8x128xf32>
    %17 = arith.addf %14, %16 : vector<8x128xf32>
    %18 = vector.extract_strided_slice %17 {offsets = [0, 0], sizes = [8, 96], strides = [1, 1]} : vector<8x128xf32> to vector<8x96xf32>
    %19 = arith.negf %18 : vector<8x96xf32>
    %20 = math.exp %19 : vector<8x96xf32>
    %cst_19 = arith.constant 1.000000e+00 : f32
    %21 = vector.broadcast %cst_19 : f32 to vector<8x96xf32>
    %22 = arith.addf %21, %20 : vector<8x96xf32>
    %23 = arith.divf %21, %22 : vector<8x96xf32>
    %24 = vector.extract_strided_slice %17 {offsets = [0, 96], sizes = [8, 32], strides = [1, 1]} : vector<8x128xf32> to vector<8x32xf32>
    %25 = math.tanh %24 : vector<8x32xf32>
    %26 = vector.extract_strided_slice %23 {offsets = [0, 0], sizes = [8, 32], strides = [1, 1]} : vector<8x96xf32> to vector<8x32xf32>
    %27 = vector.extract_strided_slice %23 {offsets = [0, 32], sizes = [8, 32], strides = [1, 1]} : vector<8x96xf32> to vector<8x32xf32>
    %28 = vector.extract_strided_slice %23 {offsets = [0, 64], sizes = [8, 32], strides = [1, 1]} : vector<8x96xf32> to vector<8x32xf32>
    %29 = arith.mulf %27, %13 : vector<8x32xf32>
    %30 = arith.mulf %26, %25 : vector<8x32xf32>
    %31 = arith.addf %29, %30 : vector<8x32xf32>
    %32 = math.tanh %31 : vector<8x32xf32>
    %33 = arith.mulf %28, %32 : vector<8x32xf32>
    %34 = arith.truncf %33 : vector<8x32xf32> to vector<8x32xbf16>
    %cst_20 = arith.constant dense<0.000000e+00> : vector<8x128xf32>
    %35 = tpu.matmul %34, %10, %cst_20 {dimension_numbers = #tpu.dot_dimension_numbers<[1], [0], [0], [1], [0, 0, 1, 1], [], []>} : vector<8x32xbf16>, vector<32x128xbf16>, vector<8x128xf32> -> vector<8x128xf32>
    %36 = vector.broadcast %11 : vector<1x128xf32> to vector<8x128xf32>
    %37 = arith.addf %35, %36 : vector<8x128xf32>
    %c0_21 = arith.constant 0 : index
    %c0_22 = arith.constant 0 : index
    %38 = vector.load %arg12[%c0_21, %c0_22] : memref<48x128xf32, #tpu.memory_space<vmem>>, vector<8x128xf32>
    tpu.vector_store %arg12[%c0_21, %c0_22], %37 {strides = array<i32>} : memref<48x128xf32, #tpu.memory_space<vmem>>, vector<8x128xf32>,
    %c8 = arith.constant 8 : index
    %c0_23 = arith.constant 0 : index
    %39 = vector.load %arg11[%c8, %c0_23] : memref<48x128xf32, #tpu.memory_space<vmem>>, vector<8x128xf32>
    %40 = arith.truncf %33 : vector<8x32xf32> to vector<8x32xbf16>
    %cst_24 = arith.constant dense<0.000000e+00> : vector<8x128xf32>
    %41 = tpu.matmul %40, %9, %cst_24 {dimension_numbers = #tpu.dot_dimension_numbers<[1], [0], [0], [1], [0, 0, 1, 1], [], []>} : vector<8x32xbf16>, vector<32x128xbf16>, vector<8x128xf32> -> vector<8x128xf32>
    %42 = arith.addf %39, %41 : vector<8x128xf32>
    %43 = vector.extract_strided_slice %42 {offsets = [0, 0], sizes = [8, 96], strides = [1, 1]} : vector<8x128xf32> to vector<8x96xf32>
    %44 = arith.negf %43 : vector<8x96xf32>
    %45 = math.exp %44 : vector<8x96xf32>
    %cst_25 = arith.constant 1.000000e+00 : f32
    %46 = vector.broadcast %cst_25 : f32 to vector<8x96xf32>
    %47 = arith.addf %46, %45 : vector<8x96xf32>
    %48 = arith.divf %46, %47 : vector<8x96xf32>
    %49 = vector.extract_strided_slice %42 {offsets = [0, 96], sizes = [8, 32], strides = [1, 1]} : vector<8x128xf32> to vector<8x32xf32>
    %50 = math.tanh %49 : vector<8x32xf32>
    %51 = vector.extract_strided_slice %48 {offsets = [0, 0], sizes = [8, 32], strides = [1, 1]} : vector<8x96xf32> to vector<8x32xf32>
    %52 = vector.extract_strided_slice %48 {offsets = [0, 32], sizes = [8, 32], strides = [1, 1]} : vector<8x96xf32> to vector<8x32xf32>
    %53 = vector.extract_strided_slice %48 {offsets = [0, 64], sizes = [8, 32], strides = [1, 1]} : vector<8x96xf32> to vector<8x32xf32>
    %54 = arith.mulf %52, %31 : vector<8x32xf32>
    %55 = arith.mulf %51, %50 : vector<8x32xf32>
    %56 = arith.addf %54, %55 : vector<8x32xf32>
    %57 = math.tanh %56 : vector<8x32xf32>
    %58 = arith.mulf %53, %57 : vector<8x32xf32>
    %59 = arith.truncf %58 : vector<8x32xf32> to vector<8x32xbf16>
    %cst_26 = arith.constant dense<0.000000e+00> : vector<8x128xf32>
    %60 = tpu.matmul %59, %10, %cst_26 {dimension_numbers = #tpu.dot_dimension_numbers<[1], [0], [0], [1], [0, 0, 1, 1], [], []>} : vector<8x32xbf16>, vector<32x128xbf16>, vector<8x128xf32> -> vector<8x128xf32>
    %61 = vector.broadcast %11 : vector<1x128xf32> to vector<8x128xf32>
    %62 = arith.addf %60, %61 : vector<8x128xf32>
    %c8_27 = arith.constant 8 : index
    %c0_28 = arith.constant 0 : index
    %63 = vector.load %arg12[%c8_27, %c0_28] : memref<48x128xf32, #tpu.memory_space<vmem>>, vector<8x128xf32>
    tpu.vector_store %arg12[%c8_27, %c0_28], %62 {strides = array<i32>} : memref<48x128xf32, #tpu.memory_space<vmem>>, vector<8x128xf32>,
    %c16 = arith.constant 16 : index
    %c0_29 = arith.constant 0 : index
    %64 = vector.load %arg11[%c16, %c0_29] : memref<48x128xf32, #tpu.memory_space<vmem>>, vector<8x128xf32>
    %65 = arith.truncf %58 : vector<8x32xf32> to vector<8x32xbf16>
    %cst_30 = arith.constant dense<0.000000e+00> : vector<8x128xf32>
    %66 = tpu.matmul %65, %9, %cst_30 {dimension_numbers = #tpu.dot_dimension_numbers<[1], [0], [0], [1], [0, 0, 1, 1], [], []>} : vector<8x32xbf16>, vector<32x128xbf16>, vector<8x128xf32> -> vector<8x128xf32>
    %67 = arith.addf %64, %66 : vector<8x128xf32>
    %68 = vector.extract_strided_slice %67 {offsets = [0, 0], sizes = [8, 96], strides = [1, 1]} : vector<8x128xf32> to vector<8x96xf32>
    %69 = arith.negf %68 : vector<8x96xf32>
    %70 = math.exp %69 : vector<8x96xf32>
    %cst_31 = arith.constant 1.000000e+00 : f32
    %71 = vector.broadcast %cst_31 : f32 to vector<8x96xf32>
    %72 = arith.addf %71, %70 : vector<8x96xf32>
    %73 = arith.divf %71, %72 : vector<8x96xf32>
    %74 = vector.extract_strided_slice %67 {offsets = [0, 96], sizes = [8, 32], strides = [1, 1]} : vector<8x128xf32> to vector<8x32xf32>
    %75 = math.tanh %74 : vector<8x32xf32>
    %76 = vector.extract_strided_slice %73 {offsets = [0, 0], sizes = [8, 32], strides = [1, 1]} : vector<8x96xf32> to vector<8x32xf32>
    %77 = vector.extract_strided_slice %73 {offsets = [0, 32], sizes = [8, 32], strides = [1, 1]} : vector<8x96xf32> to vector<8x32xf32>
    %78 = vector.extract_strided_slice %73 {offsets = [0, 64], sizes = [8, 32], strides = [1, 1]} : vector<8x96xf32> to vector<8x32xf32>
    %79 = arith.mulf %77, %56 : vector<8x32xf32>
    %80 = arith.mulf %76, %75 : vector<8x32xf32>
    %81 = arith.addf %79, %80 : vector<8x32xf32>
    %82 = math.tanh %81 : vector<8x32xf32>
    %83 = arith.mulf %78, %82 : vector<8x32xf32>
    %84 = arith.truncf %83 : vector<8x32xf32> to vector<8x32xbf16>
    %cst_32 = arith.constant dense<0.000000e+00> : vector<8x128xf32>
    %85 = tpu.matmul %84, %10, %cst_32 {dimension_numbers = #tpu.dot_dimension_numbers<[1], [0], [0], [1], [0, 0, 1, 1], [], []>} : vector<8x32xbf16>, vector<32x128xbf16>, vector<8x128xf32> -> vector<8x128xf32>
    %86 = vector.broadcast %11 : vector<1x128xf32> to vector<8x128xf32>
    %87 = arith.addf %85, %86 : vector<8x128xf32>
    %c16_33 = arith.constant 16 : index
    %c0_34 = arith.constant 0 : index
    %88 = vector.load %arg12[%c16_33, %c0_34] : memref<48x128xf32, #tpu.memory_space<vmem>>, vector<8x128xf32>
    tpu.vector_store %arg12[%c16_33, %c0_34], %87 {strides = array<i32>} : memref<48x128xf32, #tpu.memory_space<vmem>>, vector<8x128xf32>,
    %c24 = arith.constant 24 : index
    %c0_35 = arith.constant 0 : index
    %89 = vector.load %arg11[%c24, %c0_35] : memref<48x128xf32, #tpu.memory_space<vmem>>, vector<8x128xf32>
    %90 = arith.truncf %83 : vector<8x32xf32> to vector<8x32xbf16>
    %cst_36 = arith.constant dense<0.000000e+00> : vector<8x128xf32>
    %91 = tpu.matmul %90, %9, %cst_36 {dimension_numbers = #tpu.dot_dimension_numbers<[1], [0], [0], [1], [0, 0, 1, 1], [], []>} : vector<8x32xbf16>, vector<32x128xbf16>, vector<8x128xf32> -> vector<8x128xf32>
    %92 = arith.addf %89, %91 : vector<8x128xf32>
    %93 = vector.extract_strided_slice %92 {offsets = [0, 0], sizes = [8, 96], strides = [1, 1]} : vector<8x128xf32> to vector<8x96xf32>
    %94 = arith.negf %93 : vector<8x96xf32>
    %95 = math.exp %94 : vector<8x96xf32>
    %cst_37 = arith.constant 1.000000e+00 : f32
    %96 = vector.broadcast %cst_37 : f32 to vector<8x96xf32>
    %97 = arith.addf %96, %95 : vector<8x96xf32>
    %98 = arith.divf %96, %97 : vector<8x96xf32>
    %99 = vector.extract_strided_slice %92 {offsets = [0, 96], sizes = [8, 32], strides = [1, 1]} : vector<8x128xf32> to vector<8x32xf32>
    %100 = math.tanh %99 : vector<8x32xf32>
    %101 = vector.extract_strided_slice %98 {offsets = [0, 0], sizes = [8, 32], strides = [1, 1]} : vector<8x96xf32> to vector<8x32xf32>
    %102 = vector.extract_strided_slice %98 {offsets = [0, 32], sizes = [8, 32], strides = [1, 1]} : vector<8x96xf32> to vector<8x32xf32>
    %103 = vector.extract_strided_slice %98 {offsets = [0, 64], sizes = [8, 32], strides = [1, 1]} : vector<8x96xf32> to vector<8x32xf32>
    %104 = arith.mulf %102, %81 : vector<8x32xf32>
    %105 = arith.mulf %101, %100 : vector<8x32xf32>
    %106 = arith.addf %104, %105 : vector<8x32xf32>
    %107 = math.tanh %106 : vector<8x32xf32>
    %108 = arith.mulf %103, %107 : vector<8x32xf32>
    %109 = arith.truncf %108 : vector<8x32xf32> to vector<8x32xbf16>
    %cst_38 = arith.constant dense<0.000000e+00> : vector<8x128xf32>
    %110 = tpu.matmul %109, %10, %cst_38 {dimension_numbers = #tpu.dot_dimension_numbers<[1], [0], [0], [1], [0, 0, 1, 1], [], []>} : vector<8x32xbf16>, vector<32x128xbf16>, vector<8x128xf32> -> vector<8x128xf32>
    %111 = vector.broadcast %11 : vector<1x128xf32> to vector<8x128xf32>
    %112 = arith.addf %110, %111 : vector<8x128xf32>
    %c24_39 = arith.constant 24 : index
    %c0_40 = arith.constant 0 : index
    %113 = vector.load %arg12[%c24_39, %c0_40] : memref<48x128xf32, #tpu.memory_space<vmem>>, vector<8x128xf32>
    tpu.vector_store %arg12[%c24_39, %c0_40], %112 {strides = array<i32>} : memref<48x128xf32, #tpu.memory_space<vmem>>, vector<8x128xf32>,
    %c32 = arith.constant 32 : index
    %c0_41 = arith.constant 0 : index
    %114 = vector.load %arg11[%c32, %c0_41] : memref<48x128xf32, #tpu.memory_space<vmem>>, vector<8x128xf32>
    %115 = arith.truncf %108 : vector<8x32xf32> to vector<8x32xbf16>
    %cst_42 = arith.constant dense<0.000000e+00> : vector<8x128xf32>
    %116 = tpu.matmul %115, %9, %cst_42 {dimension_numbers = #tpu.dot_dimension_numbers<[1], [0], [0], [1], [0, 0, 1, 1], [], []>} : vector<8x32xbf16>, vector<32x128xbf16>, vector<8x128xf32> -> vector<8x128xf32>
    %117 = arith.addf %114, %116 : vector<8x128xf32>
    %118 = vector.extract_strided_slice %117 {offsets = [0, 0], sizes = [8, 96], strides = [1, 1]} : vector<8x128xf32> to vector<8x96xf32>
    %119 = arith.negf %118 : vector<8x96xf32>
    %120 = math.exp %119 : vector<8x96xf32>
    %cst_43 = arith.constant 1.000000e+00 : f32
    %121 = vector.broadcast %cst_43 : f32 to vector<8x96xf32>
    %122 = arith.addf %121, %120 : vector<8x96xf32>
    %123 = arith.divf %121, %122 : vector<8x96xf32>
    %124 = vector.extract_strided_slice %117 {offsets = [0, 96], sizes = [8, 32], strides = [1, 1]} : vector<8x128xf32> to vector<8x32xf32>
    %125 = math.tanh %124 : vector<8x32xf32>
    %126 = vector.extract_strided_slice %123 {offsets = [0, 0], sizes = [8, 32], strides = [1, 1]} : vector<8x96xf32> to vector<8x32xf32>
    %127 = vector.extract_strided_slice %123 {offsets = [0, 32], sizes = [8, 32], strides = [1, 1]} : vector<8x96xf32> to vector<8x32xf32>
    %128 = vector.extract_strided_slice %123 {offsets = [0, 64], sizes = [8, 32], strides = [1, 1]} : vector<8x96xf32> to vector<8x32xf32>
    %129 = arith.mulf %127, %106 : vector<8x32xf32>
    %130 = arith.mulf %126, %125 : vector<8x32xf32>
    %131 = arith.addf %129, %130 : vector<8x32xf32>
    %132 = math.tanh %131 : vector<8x32xf32>
    %133 = arith.mulf %128, %132 : vector<8x32xf32>
    %134 = arith.truncf %133 : vector<8x32xf32> to vector<8x32xbf16>
    %cst_44 = arith.constant dense<0.000000e+00> : vector<8x128xf32>
    %135 = tpu.matmul %134, %10, %cst_44 {dimension_numbers = #tpu.dot_dimension_numbers<[1], [0], [0], [1], [0, 0, 1, 1], [], []>} : vector<8x32xbf16>, vector<32x128xbf16>, vector<8x128xf32> -> vector<8x128xf32>
    %136 = vector.broadcast %11 : vector<1x128xf32> to vector<8x128xf32>
    %137 = arith.addf %135, %136 : vector<8x128xf32>
    %c32_45 = arith.constant 32 : index
    %c0_46 = arith.constant 0 : index
    %138 = vector.load %arg12[%c32_45, %c0_46] : memref<48x128xf32, #tpu.memory_space<vmem>>, vector<8x128xf32>
    tpu.vector_store %arg12[%c32_45, %c0_46], %137 {strides = array<i32>} : memref<48x128xf32, #tpu.memory_space<vmem>>, vector<8x128xf32>,
    %c40 = arith.constant 40 : index
    %c0_47 = arith.constant 0 : index
    %139 = vector.load %arg11[%c40, %c0_47] : memref<48x128xf32, #tpu.memory_space<vmem>>, vector<8x128xf32>
    %140 = arith.truncf %133 : vector<8x32xf32> to vector<8x32xbf16>
    %cst_48 = arith.constant dense<0.000000e+00> : vector<8x128xf32>
    %141 = tpu.matmul %140, %9, %cst_48 {dimension_numbers = #tpu.dot_dimension_numbers<[1], [0], [0], [1], [0, 0, 1, 1], [], []>} : vector<8x32xbf16>, vector<32x128xbf16>, vector<8x128xf32> -> vector<8x128xf32>
    %142 = arith.addf %139, %141 : vector<8x128xf32>
    %143 = vector.extract_strided_slice %142 {offsets = [0, 0], sizes = [8, 96], strides = [1, 1]} : vector<8x128xf32> to vector<8x96xf32>
    %144 = arith.negf %143 : vector<8x96xf32>
    %145 = math.exp %144 : vector<8x96xf32>
    %cst_49 = arith.constant 1.000000e+00 : f32
    %146 = vector.broadcast %cst_49 : f32 to vector<8x96xf32>
    %147 = arith.addf %146, %145 : vector<8x96xf32>
    %148 = arith.divf %146, %147 : vector<8x96xf32>
    %149 = vector.extract_strided_slice %142 {offsets = [0, 96], sizes = [8, 32], strides = [1, 1]} : vector<8x128xf32> to vector<8x32xf32>
    %150 = math.tanh %149 : vector<8x32xf32>
    %151 = vector.extract_strided_slice %148 {offsets = [0, 0], sizes = [8, 32], strides = [1, 1]} : vector<8x96xf32> to vector<8x32xf32>
    %152 = vector.extract_strided_slice %148 {offsets = [0, 32], sizes = [8, 32], strides = [1, 1]} : vector<8x96xf32> to vector<8x32xf32>
    %153 = vector.extract_strided_slice %148 {offsets = [0, 64], sizes = [8, 32], strides = [1, 1]} : vector<8x96xf32> to vector<8x32xf32>
    %154 = arith.mulf %152, %131 : vector<8x32xf32>
    %155 = arith.mulf %151, %150 : vector<8x32xf32>
    %156 = arith.addf %154, %155 : vector<8x32xf32>
    %157 = math.tanh %156 : vector<8x32xf32>
    %158 = arith.mulf %153, %157 : vector<8x32xf32>
    %159 = arith.truncf %158 : vector<8x32xf32> to vector<8x32xbf16>
    %cst_50 = arith.constant dense<0.000000e+00> : vector<8x128xf32>
    %160 = tpu.matmul %159, %10, %cst_50 {dimension_numbers = #tpu.dot_dimension_numbers<[1], [0], [0], [1], [0, 0, 1, 1], [], []>} : vector<8x32xbf16>, vector<32x128xbf16>, vector<8x128xf32> -> vector<8x128xf32>
    %161 = vector.broadcast %11 : vector<1x128xf32> to vector<8x128xf32>
    %162 = arith.addf %160, %161 : vector<8x128xf32>
    %c40_51 = arith.constant 40 : index
    %c0_52 = arith.constant 0 : index
    %163 = vector.load %arg12[%c40_51, %c0_52] : memref<48x128xf32, #tpu.memory_space<vmem>>, vector<8x128xf32>
    tpu.vector_store %arg12[%c40_51, %c0_52], %162 {strides = array<i32>} : memref<48x128xf32, #tpu.memory_space<vmem>>, vector<8x128xf32>,
    %c0_53 = arith.constant 0 : index
    %c0_54 = arith.constant 0 : index
    %c0_55 = arith.constant 0 : index
    %164 = vector.load %arg10[%c0_53, %c0_54, %c0_55] : memref<2x8x32xf32, #tpu.memory_space<vmem>>, vector<1x8x32xf32>
    %165 = vector.shape_cast %164 : vector<1x8x32xf32> to vector<8x32xf32>
    %166 = vector.shape_cast %158 : vector<8x32xf32> to vector<1x8x32xf32>
    tpu.vector_store %arg10[%c0_53, %c0_54, %c0_55], %166 {strides = array<i32>} : memref<2x8x32xf32, #tpu.memory_space<vmem>>, vector<1x8x32xf32>,
    %c0_56 = arith.constant 0 : index
    %c0_57 = arith.constant 0 : index
    %167 = vector.load %arg5[%c0_56, %c0_57] : memref<32x128xbf16, #tpu.memory_space<vmem>>, vector<32x128xbf16>
    %cst_58 = arith.constant 0.000000e+00 : f32
    %168 = vector.broadcast %cst_58 : f32 to vector<8x32xf32>
    %cst_59 = arith.constant 0.000000e+00 : f32
    %169 = vector.broadcast %cst_59 : f32 to vector<8x32xf32>
    %c0_60 = arith.constant 0 : index
    %c0_61 = arith.constant 0 : index
    %170 = vector.load %arg12[%c0_60, %c0_61] : memref<48x128xf32, #tpu.memory_space<vmem>>, vector<8x128xf32>
    %171 = arith.truncf %168 : vector<8x32xf32> to vector<8x32xbf16>
    %cst_62 = arith.constant dense<0.000000e+00> : vector<8x128xf32>
    %172 = tpu.matmul %171, %167, %cst_62 {dimension_numbers = #tpu.dot_dimension_numbers<[1], [0], [0], [1], [0, 0, 1, 1], [], []>} : vector<8x32xbf16>, vector<32x128xbf16>, vector<8x128xf32> -> vector<8x128xf32>
    %173 = arith.addf %170, %172 : vector<8x128xf32>
    %174 = vector.extract_strided_slice %173 {offsets = [0, 0], sizes = [8, 96], strides = [1, 1]} : vector<8x128xf32> to vector<8x96xf32>
    %175 = arith.negf %174 : vector<8x96xf32>
    %176 = math.exp %175 : vector<8x96xf32>
    %cst_63 = arith.constant 1.000000e+00 : f32
    %177 = vector.broadcast %cst_63 : f32 to vector<8x96xf32>
    %178 = arith.addf %177, %176 : vector<8x96xf32>
    %179 = arith.divf %177, %178 : vector<8x96xf32>
    %180 = vector.extract_strided_slice %173 {offsets = [0, 96], sizes = [8, 32], strides = [1, 1]} : vector<8x128xf32> to vector<8x32xf32>
    %181 = math.tanh %180 : vector<8x32xf32>
    %182 = vector.extract_strided_slice %179 {offsets = [0, 0], sizes = [8, 32], strides = [1, 1]} : vector<8x96xf32> to vector<8x32xf32>
    %183 = vector.extract_strided_slice %179 {offsets = [0, 32], sizes = [8, 32], strides = [1, 1]} : vector<8x96xf32> to vector<8x32xf32>
    %184 = vector.extract_strided_slice %179 {offsets = [0, 64], sizes = [8, 32], strides = [1, 1]} : vector<8x96xf32> to vector<8x32xf32>
    %185 = arith.mulf %183, %169 : vector<8x32xf32>
    %186 = arith.mulf %182, %181 : vector<8x32xf32>
    %187 = arith.addf %185, %186 : vector<8x32xf32>
    %188 = math.tanh %187 : vector<8x32xf32>
    %189 = arith.mulf %184, %188 : vector<8x32xf32>
    %190 = vector.extract_strided_slice %189 {offsets = [7, 0], sizes = [1, 32], strides = [1, 1]} : vector<8x32xf32> to vector<1x32xf32>
    %c0_64 = arith.constant 0 : index
    %c0_65 = arith.constant 0 : index
    %191 = vector.load %arg13[%c0_64, %c0_65] : memref<6x32xf32, #tpu.memory_space<vmem>>, vector<1x32xf32>
    tpu.vector_store %arg13[%c0_64, %c0_65], %190 {strides = array<i32>} : memref<6x32xf32, #tpu.memory_space<vmem>>, vector<1x32xf32>,
    %c8_66 = arith.constant 8 : index
    %c0_67 = arith.constant 0 : index
    %192 = vector.load %arg12[%c8_66, %c0_67] : memref<48x128xf32, #tpu.memory_space<vmem>>, vector<8x128xf32>
    %193 = arith.truncf %189 : vector<8x32xf32> to vector<8x32xbf16>
    %cst_68 = arith.constant dense<0.000000e+00> : vector<8x128xf32>
    %194 = tpu.matmul %193, %167, %cst_68 {dimension_numbers = #tpu.dot_dimension_numbers<[1], [0], [0], [1], [0, 0, 1, 1], [], []>} : vector<8x32xbf16>, vector<32x128xbf16>, vector<8x128xf32> -> vector<8x128xf32>
    %195 = arith.addf %192, %194 : vector<8x128xf32>
    %196 = vector.extract_strided_slice %195 {offsets = [0, 0], sizes = [8, 96], strides = [1, 1]} : vector<8x128xf32> to vector<8x96xf32>
    %197 = arith.negf %196 : vector<8x96xf32>
    %198 = math.exp %197 : vector<8x96xf32>
    %cst_69 = arith.constant 1.000000e+00 : f32
    %199 = vector.broadcast %cst_69 : f32 to vector<8x96xf32>
    %200 = arith.addf %199, %198 : vector<8x96xf32>
    %201 = arith.divf %199, %200 : vector<8x96xf32>
    %202 = vector.extract_strided_slice %195 {offsets = [0, 96], sizes = [8, 32], strides = [1, 1]} : vector<8x128xf32> to vector<8x32xf32>
    %203 = math.tanh %202 : vector<8x32xf32>
    %204 = vector.extract_strided_slice %201 {offsets = [0, 0], sizes = [8, 32], strides = [1, 1]} : vector<8x96xf32> to vector<8x32xf32>
    %205 = vector.extract_strided_slice %201 {offsets = [0, 32], sizes = [8, 32], strides = [1, 1]} : vector<8x96xf32> to vector<8x32xf32>
    %206 = vector.extract_strided_slice %201 {offsets = [0, 64], sizes = [8, 32], strides = [1, 1]} : vector<8x96xf32> to vector<8x32xf32>
    %207 = arith.mulf %205, %187 : vector<8x32xf32>
    %208 = arith.mulf %204, %203 : vector<8x32xf32>
    %209 = arith.addf %207, %208 : vector<8x32xf32>
    %210 = math.tanh %209 : vector<8x32xf32>
    %211 = arith.mulf %206, %210 : vector<8x32xf32>
    %212 = vector.extract_strided_slice %211 {offsets = [7, 0], sizes = [1, 32], strides = [1, 1]} : vector<8x32xf32> to vector<1x32xf32>
    %c1 = arith.constant 1 : index
    %c0_70 = arith.constant 0 : index
    %213 = vector.load %arg13[%c1, %c0_70] : memref<6x32xf32, #tpu.memory_space<vmem>>, vector<1x32xf32>
    tpu.vector_store %arg13[%c1, %c0_70], %212 {strides = array<i32>} : memref<6x32xf32, #tpu.memory_space<vmem>>, vector<1x32xf32>,
    %c16_71 = arith.constant 16 : index
    %c0_72 = arith.constant 0 : index
    %214 = vector.load %arg12[%c16_71, %c0_72] : memref<48x128xf32, #tpu.memory_space<vmem>>, vector<8x128xf32>
    %215 = arith.truncf %211 : vector<8x32xf32> to vector<8x32xbf16>
    %cst_73 = arith.constant dense<0.000000e+00> : vector<8x128xf32>
    %216 = tpu.matmul %215, %167, %cst_73 {dimension_numbers = #tpu.dot_dimension_numbers<[1], [0], [0], [1], [0, 0, 1, 1], [], []>} : vector<8x32xbf16>, vector<32x128xbf16>, vector<8x128xf32> -> vector<8x128xf32>
    %217 = arith.addf %214, %216 : vector<8x128xf32>
    %218 = vector.extract_strided_slice %217 {offsets = [0, 0], sizes = [8, 96], strides = [1, 1]} : vector<8x128xf32> to vector<8x96xf32>
    %219 = arith.negf %218 : vector<8x96xf32>
    %220 = math.exp %219 : vector<8x96xf32>
    %cst_74 = arith.constant 1.000000e+00 : f32
    %221 = vector.broadcast %cst_74 : f32 to vector<8x96xf32>
    %222 = arith.addf %221, %220 : vector<8x96xf32>
    %223 = arith.divf %221, %222 : vector<8x96xf32>
    %224 = vector.extract_strided_slice %217 {offsets = [0, 96], sizes = [8, 32], strides = [1, 1]} : vector<8x128xf32> to vector<8x32xf32>
    %225 = math.tanh %224 : vector<8x32xf32>
    %226 = vector.extract_strided_slice %223 {offsets = [0, 0], sizes = [8, 32], strides = [1, 1]} : vector<8x96xf32> to vector<8x32xf32>
    %227 = vector.extract_strided_slice %223 {offsets = [0, 32], sizes = [8, 32], strides = [1, 1]} : vector<8x96xf32> to vector<8x32xf32>
    %228 = vector.extract_strided_slice %223 {offsets = [0, 64], sizes = [8, 32], strides = [1, 1]} : vector<8x96xf32> to vector<8x32xf32>
    %229 = arith.mulf %227, %209 : vector<8x32xf32>
    %230 = arith.mulf %226, %225 : vector<8x32xf32>
    %231 = arith.addf %229, %230 : vector<8x32xf32>
    %232 = math.tanh %231 : vector<8x32xf32>
    %233 = arith.mulf %228, %232 : vector<8x32xf32>
    %234 = vector.extract_strided_slice %233 {offsets = [7, 0], sizes = [1, 32], strides = [1, 1]} : vector<8x32xf32> to vector<1x32xf32>
    %c2 = arith.constant 2 : index
    %c0_75 = arith.constant 0 : index
    %235 = vector.load %arg13[%c2, %c0_75] : memref<6x32xf32, #tpu.memory_space<vmem>>, vector<1x32xf32>
    tpu.vector_store %arg13[%c2, %c0_75], %234 {strides = array<i32>} : memref<6x32xf32, #tpu.memory_space<vmem>>, vector<1x32xf32>,
    %c24_76 = arith.constant 24 : index
    %c0_77 = arith.constant 0 : index
    %236 = vector.load %arg12[%c24_76, %c0_77] : memref<48x128xf32, #tpu.memory_space<vmem>>, vector<8x128xf32>
    %237 = arith.truncf %233 : vector<8x32xf32> to vector<8x32xbf16>
    %cst_78 = arith.constant dense<0.000000e+00> : vector<8x128xf32>
    %238 = tpu.matmul %237, %167, %cst_78 {dimension_numbers = #tpu.dot_dimension_numbers<[1], [0], [0], [1], [0, 0, 1, 1], [], []>} : vector<8x32xbf16>, vector<32x128xbf16>, vector<8x128xf32> -> vector<8x128xf32>
    %239 = arith.addf %236, %238 : vector<8x128xf32>
    %240 = vector.extract_strided_slice %239 {offsets = [0, 0], sizes = [8, 96], strides = [1, 1]} : vector<8x128xf32> to vector<8x96xf32>
    %241 = arith.negf %240 : vector<8x96xf32>
    %242 = math.exp %241 : vector<8x96xf32>
    %cst_79 = arith.constant 1.000000e+00 : f32
    %243 = vector.broadcast %cst_79 : f32 to vector<8x96xf32>
    %244 = arith.addf %243, %242 : vector<8x96xf32>
    %245 = arith.divf %243, %244 : vector<8x96xf32>
    %246 = vector.extract_strided_slice %239 {offsets = [0, 96], sizes = [8, 32], strides = [1, 1]} : vector<8x128xf32> to vector<8x32xf32>
    %247 = math.tanh %246 : vector<8x32xf32>
    %248 = vector.extract_strided_slice %245 {offsets = [0, 0], sizes = [8, 32], strides = [1, 1]} : vector<8x96xf32> to vector<8x32xf32>
    %249 = vector.extract_strided_slice %245 {offsets = [0, 32], sizes = [8, 32], strides = [1, 1]} : vector<8x96xf32> to vector<8x32xf32>
    %250 = vector.extract_strided_slice %245 {offsets = [0, 64], sizes = [8, 32], strides = [1, 1]} : vector<8x96xf32> to vector<8x32xf32>
    %251 = arith.mulf %249, %231 : vector<8x32xf32>
    %252 = arith.mulf %248, %247 : vector<8x32xf32>
    %253 = arith.addf %251, %252 : vector<8x32xf32>
    %254 = math.tanh %253 : vector<8x32xf32>
    %255 = arith.mulf %250, %254 : vector<8x32xf32>
    %256 = vector.extract_strided_slice %255 {offsets = [7, 0], sizes = [1, 32], strides = [1, 1]} : vector<8x32xf32> to vector<1x32xf32>
    %c3 = arith.constant 3 : index
    %c0_80 = arith.constant 0 : index
    %257 = vector.load %arg13[%c3, %c0_80] : memref<6x32xf32, #tpu.memory_space<vmem>>, vector<1x32xf32>
    tpu.vector_store %arg13[%c3, %c0_80], %256 {strides = array<i32>} : memref<6x32xf32, #tpu.memory_space<vmem>>, vector<1x32xf32>,
    %c32_81 = arith.constant 32 : index
    %c0_82 = arith.constant 0 : index
    %258 = vector.load %arg12[%c32_81, %c0_82] : memref<48x128xf32, #tpu.memory_space<vmem>>, vector<8x128xf32>
    %259 = arith.truncf %255 : vector<8x32xf32> to vector<8x32xbf16>
    %cst_83 = arith.constant dense<0.000000e+00> : vector<8x128xf32>
    %260 = tpu.matmul %259, %167, %cst_83 {dimension_numbers = #tpu.dot_dimension_numbers<[1], [0], [0], [1], [0, 0, 1, 1], [], []>} : vector<8x32xbf16>, vector<32x128xbf16>, vector<8x128xf32> -> vector<8x128xf32>
    %261 = arith.addf %258, %260 : vector<8x128xf32>
    %262 = vector.extract_strided_slice %261 {offsets = [0, 0], sizes = [8, 96], strides = [1, 1]} : vector<8x128xf32> to vector<8x96xf32>
    %263 = arith.negf %262 : vector<8x96xf32>
    %264 = math.exp %263 : vector<8x96xf32>
    %cst_84 = arith.constant 1.000000e+00 : f32
    %265 = vector.broadcast %cst_84 : f32 to vector<8x96xf32>
    %266 = arith.addf %265, %264 : vector<8x96xf32>
    %267 = arith.divf %265, %266 : vector<8x96xf32>
    %268 = vector.extract_strided_slice %261 {offsets = [0, 96], sizes = [8, 32], strides = [1, 1]} : vector<8x128xf32> to vector<8x32xf32>
    %269 = math.tanh %268 : vector<8x32xf32>
    %270 = vector.extract_strided_slice %267 {offsets = [0, 0], sizes = [8, 32], strides = [1, 1]} : vector<8x96xf32> to vector<8x32xf32>
    %271 = vector.extract_strided_slice %267 {offsets = [0, 32], sizes = [8, 32], strides = [1, 1]} : vector<8x96xf32> to vector<8x32xf32>
    %272 = vector.extract_strided_slice %267 {offsets = [0, 64], sizes = [8, 32], strides = [1, 1]} : vector<8x96xf32> to vector<8x32xf32>
    %273 = arith.mulf %271, %253 : vector<8x32xf32>
    %274 = arith.mulf %270, %269 : vector<8x32xf32>
    %275 = arith.addf %273, %274 : vector<8x32xf32>
    %276 = math.tanh %275 : vector<8x32xf32>
    %277 = arith.mulf %272, %276 : vector<8x32xf32>
    %278 = vector.extract_strided_slice %277 {offsets = [7, 0], sizes = [1, 32], strides = [1, 1]} : vector<8x32xf32> to vector<1x32xf32>
    %c4 = arith.constant 4 : index
    %c0_85 = arith.constant 0 : index
    %279 = vector.load %arg13[%c4, %c0_85] : memref<6x32xf32, #tpu.memory_space<vmem>>, vector<1x32xf32>
    tpu.vector_store %arg13[%c4, %c0_85], %278 {strides = array<i32>} : memref<6x32xf32, #tpu.memory_space<vmem>>, vector<1x32xf32>,
    %c40_86 = arith.constant 40 : index
    %c0_87 = arith.constant 0 : index
    %280 = vector.load %arg12[%c40_86, %c0_87] : memref<48x128xf32, #tpu.memory_space<vmem>>, vector<8x128xf32>
    %281 = arith.truncf %277 : vector<8x32xf32> to vector<8x32xbf16>
    %cst_88 = arith.constant dense<0.000000e+00> : vector<8x128xf32>
    %282 = tpu.matmul %281, %167, %cst_88 {dimension_numbers = #tpu.dot_dimension_numbers<[1], [0], [0], [1], [0, 0, 1, 1], [], []>} : vector<8x32xbf16>, vector<32x128xbf16>, vector<8x128xf32> -> vector<8x128xf32>
    %283 = arith.addf %280, %282 : vector<8x128xf32>
    %284 = vector.extract_strided_slice %283 {offsets = [0, 0], sizes = [8, 96], strides = [1, 1]} : vector<8x128xf32> to vector<8x96xf32>
    %285 = arith.negf %284 : vector<8x96xf32>
    %286 = math.exp %285 : vector<8x96xf32>
    %cst_89 = arith.constant 1.000000e+00 : f32
    %287 = vector.broadcast %cst_89 : f32 to vector<8x96xf32>
    %288 = arith.addf %287, %286 : vector<8x96xf32>
    %289 = arith.divf %287, %288 : vector<8x96xf32>
    %290 = vector.extract_strided_slice %283 {offsets = [0, 96], sizes = [8, 32], strides = [1, 1]} : vector<8x128xf32> to vector<8x32xf32>
    %291 = math.tanh %290 : vector<8x32xf32>
    %292 = vector.extract_strided_slice %289 {offsets = [0, 0], sizes = [8, 32], strides = [1, 1]} : vector<8x96xf32> to vector<8x32xf32>
    %293 = vector.extract_strided_slice %289 {offsets = [0, 32], sizes = [8, 32], strides = [1, 1]} : vector<8x96xf32> to vector<8x32xf32>
    %294 = vector.extract_strided_slice %289 {offsets = [0, 64], sizes = [8, 32], strides = [1, 1]} : vector<8x96xf32> to vector<8x32xf32>
    %295 = arith.mulf %293, %275 : vector<8x32xf32>
    %296 = arith.mulf %292, %291 : vector<8x32xf32>
    %297 = arith.addf %295, %296 : vector<8x32xf32>
    %298 = math.tanh %297 : vector<8x32xf32>
    %299 = arith.mulf %294, %298 : vector<8x32xf32>
    %300 = vector.extract_strided_slice %299 {offsets = [7, 0], sizes = [1, 32], strides = [1, 1]} : vector<8x32xf32> to vector<1x32xf32>
    %c5 = arith.constant 5 : index
    %c0_90 = arith.constant 0 : index
    %301 = vector.load %arg13[%c5, %c0_90] : memref<6x32xf32, #tpu.memory_space<vmem>>, vector<1x32xf32>
    tpu.vector_store %arg13[%c5, %c0_90], %300 {strides = array<i32>} : memref<6x32xf32, #tpu.memory_space<vmem>>, vector<1x32xf32>,
    %c1_91 = arith.constant 1 : index
    %c0_92 = arith.constant 0 : index
    %c0_93 = arith.constant 0 : index
    %302 = vector.load %arg10[%c1_91, %c0_92, %c0_93] : memref<2x8x32xf32, #tpu.memory_space<vmem>>, vector<1x8x32xf32>
    %303 = vector.shape_cast %302 : vector<1x8x32xf32> to vector<8x32xf32>
    %304 = vector.shape_cast %299 : vector<8x32xf32> to vector<1x8x32xf32>
    tpu.vector_store %arg10[%c1_91, %c0_92, %c0_93], %304 {strides = array<i32>} : memref<2x8x32xf32, #tpu.memory_space<vmem>>, vector<1x8x32xf32>,
    %c0_94 = arith.constant 0 : index
    %c0_95 = arith.constant 0 : index
    %305 = vector.load %arg13[%c0_94, %c0_95] : memref<6x32xf32, #tpu.memory_space<vmem>>, vector<6x32xf32>
    %c0_96 = arith.constant 0 : index
    %c0_97 = arith.constant 0 : index
    %306 = vector.load %arg7[%c0_96, %c0_97] : memref<1x32xf32, #tpu.memory_space<vmem>>, vector<1x32xf32>
    %307 = vector.broadcast %306 : vector<1x32xf32> to vector<6x32xf32>
    %308 = arith.mulf %305, %307 : vector<6x32xf32>
    %cst_98 = arith.constant dense<0.000000e+00> : vector<6xf32>
    %309 = vector.multi_reduction <add>, %308, %cst_98 [1] : vector<6x32xf32> to vector<6xf32>
    %310 = vector.shape_cast %309 : vector<6xf32> to vector<6x1xf32>
    %c0_99 = arith.constant 0 : index
    %c0_100 = arith.constant 0 : index
    %311 = vector.load %arg8[%c0_99, %c0_100] : memref<1x1xf32, #tpu.memory_space<vmem>>, vector<1x1xf32>
    %312 = vector.broadcast %311 : vector<1x1xf32> to vector<6x1xf32>
    %313 = arith.addf %310, %312 : vector<6x1xf32>
    %c0_101 = arith.constant 0 : index
    %c0_102 = arith.constant 0 : index
    %314 = vector.load %arg9[%c0_101, %c0_102] : memref<6x1xf32, #tpu.memory_space<vmem>>, vector<6x1xf32>
    tpu.vector_store %arg9[%c0_101, %c0_102], %313 {strides = array<i32>} : memref<6x1xf32, #tpu.memory_space<vmem>>, vector<6x1xf32>,
    return
  }
}

</mosaic_0001>

<llo_original>
// kernel: _fused_forward.1
$region0: #{_fused_forward.1}
  #allocation0 [shape = 'u32[]', space=smem, size = 0x4, offset = 0x4, fixed_abs, tag = 'smem constant byte address 0x4 - core index']
  #allocation1 [shape = 'u32[144,128]{1,0:T(1,128)}', space=vmem, size = 0x12000, scoped, tag = 'internal scratch']
  #allocation2 [shape = 'f32[48,128]{1,0:T(8,128)}', space=vmem, size = 0x6000, scoped, tag = 'scratch operand']
  #allocation3 [shape = 'f32[48,128]{1,0:T(8,128)}', space=vmem, size = 0x6000, scoped, tag = 'scratch operand']
  #allocation4 [shape = 'f32[6,32]{1,0:T(8,128)}', space=vmem, size = 0x1000, scoped, tag = 'scratch operand']
  #allocation5 [shape = 'f32[1,1]{1,0:T(1,128)S(1)}', space=vmem, size = 0x200, scoped, tag = 'scoped memory for _fused_forward.1']
  %s0 = inlined_call_operand.hbm [shape: f32[6,8,8], index: 0, kind: input, shape index: {}]
  %s1 = inlined_call_operand.vmem [shape: bf16[8,128], index: 1, kind: input, shape index: {}]
  %s2 = inlined_call_operand.hbm [shape: bf16[32,128], index: 2, kind: input, shape index: {}]
  %s3 = inlined_call_operand.vmem [shape: f32[1,128], index: 3, kind: input, shape index: {}]
  %s4 = inlined_call_operand.vmem [shape: bf16[32,128], index: 4, kind: input, shape index: {}]
  %s5 = inlined_call_operand.hbm [shape: bf16[32,128], index: 5, kind: input, shape index: {}]
  %s6 = inlined_call_operand.vmem [shape: f32[1,128], index: 6, kind: input, shape index: {}]
  %s7 = inlined_call_operand.hbm [shape: f32[1,32], index: 7, kind: input, shape index: {}]
  %s8 = inlined_call_operand.<no memory space> [shape: f32[1,1], index: 8, kind: input, shape index: {}]
  %s9 = inlined_call_operand.vmem [shape: f32[6,1], index: 9, kind: output, shape index: {0}]
  %s10 = inlined_call_operand.hbm [shape: f32[2,8,32], index: 10, kind: output, shape index: {1}]
  %11 = xla_tuple %s9, %s10
  %s12 = sld [smem:[#allocation0]]
  $region70: #{_fused_forward.1} parent=0
    _
  %s14 = ssub.s32 1, %s12
  %s15 = scalar_select 0, %s14, %s12
  %v16 = vstv %s8
  %17 = vst [vmem:[#allocation5] sm:$0x1] %v16
  $region1: #{_fused_forward.1} parent=0
    #allocation6 [shape = 'u8[24576]{0}', space=vmem, size = 0x6000, scoped, tag = 'input window, operand 0, single buffered']
    #allocation7 [shape = 's32[1]{0}', space=sflag, size = 0x4, scoped, tag = 'scoped memory for _fused_forward.1']
    #allocation8 [shape = 's32[1]{0}', space=sflag, size = 0x4, scoped, tag = 'scoped memory for _fused_forward.1']
    #allocation9 [shape = 'u8[8192]{0}', space=vmem, size = 0x2000, scoped, tag = 'input window, operand 2, single buffered']
    #allocation10 [shape = 's32[1]{0}', space=sflag, size = 0x4, scoped, tag = 'scoped memory for _fused_forward.1']
    #allocation11 [shape = 'u8[8192]{0}', space=vmem, size = 0x2000, scoped, tag = 'input window, operand 5, single buffered']
    #allocation12 [shape = 'u8[512]{0}', space=vmem, size = 0x400, scoped, tag = 'input window, operand 7, single buffered']
    #allocation13 [shape = 's32[1]{0}', space=sflag, size = 0x4, scoped, tag = 'scoped memory for _fused_forward.1']
    #allocation14 [shape = 'u8[8192]{0}', space=vmem, size = 0x2000, scoped, tag = 'output window, operand 1, single buffered']
    %18 = vsyncpa [#allocation7], 0
    %19 = vsyncpa [#allocation10], 0
    %20 = vsyncpa [#allocation13], 0
    %21 = vsyncpa [#allocation8], 0
    // Predicated region
    $region2: #{_fused_forward.1} parent=1 // pred_check
      _
    $region3: #{_fused_forward.1} parent=1 // pred_check_branch
      %23 = sbr.rel (0) target = $region5
    $region4: #{_fused_forward.1} parent=1 // pred_region
      %s25 = ssub.s32 768, 768
      %26 = vsyncadd [#allocation7], %s25
      %s27 = sshll.u32 [#allocation6], 4
      %s28 = int_to_ptr.vmem [resolvable:$true] %s27
      %33 = dma.hbm_to_vmem [thread:$0]  %s0, 768, %s28, [#allocation7], 128, 128, 8
    $region5: #{_fused_forward.1} parent=1 // pred_fallthru
      _
    // Predicated region
    $region6: #{_fused_forward.1} parent=1 // pred_check
      _
    $region7: #{_fused_forward.1} parent=1 // pred_check_branch
      %35 = sbr.rel (0) target = $region9
    $region8: #{_fused_forward.1} parent=1 // pred_region
      _
    $region9: #{_fused_forward.1} parent=1 // pred_fallthru
      _
    // Predicated region
    $region10: #{_fused_forward.1} parent=1 // pred_check
      _
    $region11: #{_fused_forward.1} parent=1 // pred_check_branch
      %37 = sbr.rel (0) target = $region13
    $region12: #{_fused_forward.1} parent=1 // pred_region
      %s39 = ssub.s32 256, 256
      %40 = vsyncadd [#allocation10], %s39
      %s41 = sshll.u32 [#allocation9], 4
      %s42 = int_to_ptr.vmem [resolvable:$true] %s41
      %47 = dma.hbm_to_vmem [thread:$0]  %s2, 256, %s42, [#allocation10], 64, 64, 4
    $region13: #{_fused_forward.1} parent=1 // pred_fallthru
      _
    // Predicated region
    $region14: #{_fused_forward.1} parent=1 // pred_check
      _
    $region15: #{_fused_forward.1} parent=1 // pred_check_branch
      %49 = sbr.rel (0) target = $region17
    $region16: #{_fused_forward.1} parent=1 // pred_region
      _
    $region17: #{_fused_forward.1} parent=1 // pred_fallthru
      _
    // Predicated region
    $region18: #{_fused_forward.1} parent=1 // pred_check
      _
    $region19: #{_fused_forward.1} parent=1 // pred_check_branch
      %51 = sbr.rel (0) target = $region21
    $region20: #{_fused_forward.1} parent=1 // pred_region
      _
    $region21: #{_fused_forward.1} parent=1 // pred_fallthru
      _
    // Predicated region
    $region22: #{_fused_forward.1} parent=1 // pred_check
      _
    $region23: #{_fused_forward.1} parent=1 // pred_check_branch
      %53 = sbr.rel (0) target = $region25
    $region24: #{_fused_forward.1} parent=1 // pred_region
      %s55 = ssub.s32 256, 256
      %56 = vsyncadd [#allocation10], %s55
      %s57 = sshll.u32 [#allocation11], 4
      %s58 = int_to_ptr.vmem [resolvable:$true] %s57
      %63 = dma.hbm_to_vmem [thread:$0]  %s5, 256, %s58, [#allocation10], 64, 64, 4
    $region25: #{_fused_forward.1} parent=1 // pred_fallthru
      _
    // Predicated region
    $region26: #{_fused_forward.1} parent=1 // pred_check
      _
    $region27: #{_fused_forward.1} parent=1 // pred_check_branch
      %65 = sbr.rel (0) target = $region29
    $region28: #{_fused_forward.1} parent=1 // pred_region
      _
    $region29: #{_fused_forward.1} parent=1 // pred_fallthru
      _
    // Predicated region
    $region30: #{_fused_forward.1} parent=1 // pred_check
      _
    $region31: #{_fused_forward.1} parent=1 // pred_check_branch
      %67 = sbr.rel (0) target = $region33
    $region32: #{_fused_forward.1} parent=1 // pred_region
      %s69 = ssub.s32 16, 16
      %70 = vsyncadd [#allocation13], %s69
      %s72 = sshll.u32 [#allocation12], 4
      %s73 = int_to_ptr.vmem [resolvable:$true] %s72
      %75 = dma.hbm_to_vmem [thread:$0]  %s7, 16, %s73, [#allocation13]
    $region33: #{_fused_forward.1} parent=1 // pred_fallthru
      _
    // Predicated region
    $region34: #{_fused_forward.1} parent=1 // pred_check
      _
    $region35: #{_fused_forward.1} parent=1 // pred_check_branch
      %77 = sbr.rel (0) target = $region37
    $region36: #{_fused_forward.1} parent=1 // pred_region
      _
    $region37: #{_fused_forward.1} parent=1 // pred_fallthru
      _
    // Predicated region
    $region38: #{_fused_forward.1} parent=1 // pred_check
      _
    $region39: #{_fused_forward.1} parent=1 // pred_check_branch
      %79 = sbr.rel (0) target = $region41
    $region40: #{_fused_forward.1} parent=1 // pred_region
      %80 = dma.done [#allocation7], 768
    $region41: #{_fused_forward.1} parent=1 // pred_fallthru
      _
    // Predicated region
    $region42: #{_fused_forward.1} parent=1 // pred_check
      _
    $region43: #{_fused_forward.1} parent=1 // pred_check_branch
      %82 = sbr.rel (0) target = $region45
    $region44: #{_fused_forward.1} parent=1 // pred_region
      %83 = dma.done [#allocation10], 256
    $region45: #{_fused_forward.1} parent=1 // pred_fallthru
      _
    // Predicated region
    $region46: #{_fused_forward.1} parent=1 // pred_check
      _
    $region47: #{_fused_forward.1} parent=1 // pred_check_branch
      %85 = sbr.rel (0) target = $region49
    $region48: #{_fused_forward.1} parent=1 // pred_region
      %86 = dma.done [#allocation10], 256
    $region49: #{_fused_forward.1} parent=1 // pred_fallthru
      _
    // Predicated region
    $region50: #{_fused_forward.1} parent=1 // pred_check
      _
    $region51: #{_fused_forward.1} parent=1 // pred_check_branch
      %88 = sbr.rel (0) target = $region53
    $region52: #{_fused_forward.1} parent=1 // pred_region
      %89 = dma.done [#allocation13], 16
    $region53: #{_fused_forward.1} parent=1 // pred_fallthru
      _
    %v91 = vld [vmem:[%s1] sm:$0xf]
    %v92 = vld [vmem:[%s3] sm:$0x1]
    %v93 = vld [vmem:[#allocation6] sm:$0xff]
    %v94 = vld [vmem:[#allocation6 + $0x8] sm:$0xff]
    %v95 = vld [vmem:[#allocation6 + $0x10] sm:$0xff]
    %v96 = vld [vmem:[#allocation6 + $0x18] sm:$0xff]
    %v97 = vld [vmem:[#allocation6 + $0x20] sm:$0xff]
    %v98 = vld [vmem:[#allocation6 + $0x28] sm:$0xff]
    %v99 = vpack.c.bf16 %v94, %v93
    %v100 = vpack.c.bf16 %v96, %v95
    %v101 = vpack.c.bf16 %v98, %v97
    %v103 = vlaneseq
    %v104 = vshrl.u32 %v103, 7
    %v105 = vsub.s32 0, %v104
    %v106 = vrot.slane %v92, %v105
    %vm108 = vcmask 64512
    %v110 = vsel %vm108, %v99, 0
    %v113 = vsel %vm108, %v100, 0
    %v116 = vsel %vm108, %v101, 0
    %vm118 = vcmask 1043456
    %v120 = vsel %vm118, %v91, 0
    %122 = vmatprep.subr.bf16.mxu0 0
    %123 = vmatpush1.bf16.msra.mxu0 %v120
    %124 = vmatprep.subr.bf16.mxu0 0
    %125 = vmatpush1.bf16.msra.mxu0 0
    %126 = vmatprep.subr.bf16.mxu0 0
    %127 = vmatpush1.bf16.msra.mxu0 0
    %128 = vmatprep.subr.bf16.mxu0 0
    %129 = vmatpush1.bf16.msra.mxu0 0
    %130 = vmatprep.subr.bf16.mxu0 0
    %131 = vmatpush1.bf16.msra.mxu0 0
    %132 = vmatprep.subr.bf16.mxu0 0
    %133 = vmatpush1.bf16.msra.mxu0 0
    %134 = vmatprep.subr.bf16.mxu0 0
    %135 = vmatpush1.bf16.msra.mxu0 0
    %136 = vmatprep.subr.bf16.mxu0 0
    %137 = vmatpush1.bf16.msra.mxu0 0
    %138 = vmatprep.subr.bf16.mxu0 0
    %139 = vmatpush1.bf16.msra.mxu0 0
    %140 = vmatprep.subr.bf16.mxu0 0
    %141 = vmatpush1.bf16.msra.mxu0 0
    %142 = vmatprep.subr.bf16.mxu0 0
    %143 = vmatpush1.bf16.msra.mxu0 0
    %144 = vmatprep.subr.bf16.mxu0 0
    %145 = vmatpush1.bf16.msra.mxu0 0
    %146 = vmatprep.subr.bf16.mxu0 0
    %147 = vmatpush1.bf16.msra.mxu0 0
    %148 = vmatprep.subr.bf16.mxu0 0
    %149 = vmatpush1.bf16.msra.mxu0 0
    %150 = vmatprep.subr.bf16.mxu0 0
    %151 = vmatpush1.bf16.msra.mxu0 0
    %152 = vmatprep.subr.bf16.mxu0 0
    %153 = vmatpush1.bf16.msra.mxu0 0
    %154 = vmatprep.mubr.bf16.mxu0 0
    %155 = vmatmul.mubr.bf16.gmra.mrb[0].mxu0 %v110
    %v156 = vpop.f32.mrb[0].mxu0
    %v157 = vadd.f32 %v106, %v156
    %v158 = vpop.f32.mrb[0].mxu0
    %v159 = vpop.f32.mrb[0].mxu0
    %v160 = vadd.f32 %v106, %v159
    %v161 = vpop.f32.mrb[0].mxu0
    %162 = vmatprep.mubr.bf16.mxu0 0
    %163 = vmatmul.mubr.bf16.gmra.mrb[0].mxu0 %v113
    %v164 = vpop.f32.mrb[0].mxu0
    %v165 = vadd.f32 %v106, %v164
    %v166 = vpop.f32.mrb[0].mxu0
    %v167 = vpop.f32.mrb[0].mxu0
    %v168 = vadd.f32 %v106, %v167
    %v169 = vpop.f32.mrb[0].mxu0
    %170 = vmatprep.mubr.bf16.mxu0 0
    %171 = vmatmul.mubr.bf16.gmra.mrb[0].mxu0 %v116
    %v172 = vpop.f32.mrb[0].mxu0
    %v173 = vadd.f32 %v106, %v172
    %v174 = vpop.f32.mrb[0].mxu0
    %v175 = vpop.f32.mrb[0].mxu0
    %v176 = vadd.f32 %v106, %v175
    %v177 = vpop.f32.mrb[0].mxu0
    %178 = vdwg.mxu0
    %179 = vst [vmem:[#allocation2] sm:$0xff] %v157
    %180 = vst [vmem:[#allocation2 + $0x8] sm:$0xff] %v160
    %181 = vst [vmem:[#allocation2 + $0x10] sm:$0xff] %v165
    %182 = vst [vmem:[#allocation2 + $0x18] sm:$0xff] %v168
    %183 = vst [vmem:[#allocation2 + $0x20] sm:$0xff] %v173
    %184 = vst [vmem:[#allocation2 + $0x28] sm:$0xff] %v176
    %v185 = vld [vmem:[#allocation9] sm:$0xf]
    %v186 = vld [vmem:[#allocation9 + $0x4] sm:$0xf]
    %v187 = vld [vmem:[#allocation9 + $0x8] sm:$0xf]
    %v188 = vld [vmem:[#allocation9 + $0xc] sm:$0xf]
    %v189 = vld [vmem:[%s4] sm:$0xf]
    %v190 = vld [vmem:[%s4 + $0x4] sm:$0xf]
    %v191 = vld [vmem:[%s4 + $0x8] sm:$0xf]
    %v192 = vld [vmem:[%s4 + $0xc] sm:$0xf]
    %v193 = vld [vmem:[%s6] sm:$0x1]
    %v194 = vld [vmem:[#allocation2] sm:$0xff]
    %v199 = vunpack.c.l.b16 %v185
    %v200 = vunpack.c.l.b16 %v186
    %v201 = vunpack.c.l.b16 %v187
    %v202 = vunpack.c.l.b16 %v188
    %v203 = vpack.c.b16 %v200, %v199
    %v204 = vpack.c.b16 %v202, %v201
    %vm207 = vcmask 261120
    %v209 = vsel %vm207, 0, 0
    %211 = vmatprep.subr.bf16.mxu0 0
    %212 = vmatpush1.bf16.msra.mxu0 %v203
    %213 = vmatprep.subr.bf16.mxu0 0
    %214 = vmatpush1.bf16.msra.mxu0 %v204
    %215 = vmatprep.subr.bf16.mxu0 0
    %216 = vmatpush1.bf16.msra.mxu0 0
    %217 = vmatprep.subr.bf16.mxu0 0
    %218 = vmatpush1.bf16.msra.mxu0 0
    %219 = vmatprep.subr.bf16.mxu0 0
    %220 = vmatpush1.bf16.msra.mxu0 0
    %221 = vmatprep.subr.bf16.mxu0 0
    %222 = vmatpush1.bf16.msra.mxu0 0
    %223 = vmatprep.subr.bf16.mxu0 0
    %224 = vmatpush1.bf16.msra.mxu0 0
    %225 = vmatprep.subr.bf16.mxu0 0
    %226 = vmatpush1.bf16.msra.mxu0 0
    %227 = vmatprep.subr.bf16.mxu0 0
    %228 = vmatpush1.bf16.msra.mxu0 0
    %229 = vmatprep.subr.bf16.mxu0 0
    %230 = vmatpush1.bf16.msra.mxu0 0
    %231 = vmatprep.subr.bf16.mxu0 0
    %232 = vmatpush1.bf16.msra.mxu0 0
    %233 = vmatprep.subr.bf16.mxu0 0
    %234 = vmatpush1.bf16.msra.mxu0 0
    %235 = vmatprep.subr.bf16.mxu0 0
    %236 = vmatpush1.bf16.msra.mxu0 0
    %237 = vmatprep.subr.bf16.mxu0 0
    %238 = vmatpush1.bf16.msra.mxu0 0
    %239 = vmatprep.subr.bf16.mxu0 0
    %240 = vmatpush1.bf16.msra.mxu0 0
    %241 = vmatprep.subr.bf16.mxu0 0
    %242 = vmatpush1.bf16.msra.mxu0 0
    %243 = vmatprep.mubr.bf16.mxu0 0
    %244 = vmatmul.mubr.bf16.gmra.mrb[0].mxu0 %v209
    %v245 = vpop.f32.mrb[0].mxu0
    %v246 = vadd.f32 0.0, %v245
    %v247 = vpop.f32.mrb[0].mxu0
    %v248 = vpop.f32.mrb[0].mxu0
    %v249 = vpop.f32.mrb[0].mxu0
    %250 = vdwg.mxu0
    %v251 = vadd.f32 %v194, %v246
    %v252 = vxor.u32 %v251, 2147483648
    %v253 = vmul.f32 %v252, 1.442695
    %v254 = vpow.pop %v253
    %v255 = vadd.f32 %v254, 1.0
    %v256 = vrcp.pop %v255
    %v257 = vmul.f32 1.0, %v256
    %v258 = vtanh.pop %v251
    %v259 = vmul.f32 %v257, 0.0
    %261 = vrot.lane.b32.xlu0 %v258, 32
    %v262 = vpop.permute.xlu0 %261
    %v264 = vmul.f32 %v257, %v262
    %266 = vrot.lane.b32.xlu0 %v264, 32
    %v267 = vpop.permute.xlu0 %266
    %v269 = vadd.f32 %v259, %v267
    %v270 = vtanh.pop %v269
    %272 = vrot.lane.b32.xlu0 %v270, 32
    %v273 = vpop.permute.xlu0 %272
    %v275 = vmul.f32 %v257, %v273
    %v276 = vpack.c.bf16 %v275, %v275
    %v278 = vlaneseq
    %v279 = vshrl.u32 %v278, 7
    %v280 = vsub.s32 0, %v279
    %v281 = vrot.slane %v193, %v280
    %284 = vrot.lane.b32.xlu0 %v276, 64
    %v285 = vpop.permute.xlu0 %284
    %v290 = vunpack.c.l.b16 %v189
    %v291 = vunpack.c.l.b16 %v190
    %v292 = vunpack.c.l.b16 %v191
    %v293 = vunpack.c.l.b16 %v192
    %v294 = vpack.c.b16 %v291, %v290
    %v295 = vpack.c.b16 %v293, %v292
    %v299 = vsel %vm207, %v285, 0
    %301 = vmatprep.subr.bf16.mxu0 0
    %302 = vmatpush1.bf16.msra.mxu0 %v294
    %303 = vmatprep.subr.bf16.mxu0 0
    %304 = vmatpush1.bf16.msra.mxu0 %v295
    %305 = vmatprep.subr.bf16.mxu0 0
    %306 = vmatpush1.bf16.msra.mxu0 0
    %307 = vmatprep.subr.bf16.mxu0 0
    %308 = vmatpush1.bf16.msra.mxu0 0
    %309 = vmatprep.subr.bf16.mxu0 0
    %310 = vmatpush1.bf16.msra.mxu0 0
    %311 = vmatprep.subr.bf16.mxu0 0
    %312 = vmatpush1.bf16.msra.mxu0 0
    %313 = vmatprep.subr.bf16.mxu0 0
    %314 = vmatpush1.bf16.msra.mxu0 0
    %315 = vmatprep.subr.bf16.mxu0 0
    %316 = vmatpush1.bf16.msra.mxu0 0
    %317 = vmatprep.subr.bf16.mxu0 0
    %318 = vmatpush1.bf16.msra.mxu0 0
    %319 = vmatprep.subr.bf16.mxu0 0
    %320 = vmatpush1.bf16.msra.mxu0 0
    %321 = vmatprep.subr.bf16.mxu0 0
    %322 = vmatpush1.bf16.msra.mxu0 0
    %323 = vmatprep.subr.bf16.mxu0 0
    %324 = vmatpush1.bf16.msra.mxu0 0
    %325 = vmatprep.subr.bf16.mxu0 0
    %326 = vmatpush1.bf16.msra.mxu0 0
    %327 = vmatprep.subr.bf16.mxu0 0
    %328 = vmatpush1.bf16.msra.mxu0 0
    %329 = vmatprep.subr.bf16.mxu0 0
    %330 = vmatpush1.bf16.msra.mxu0 0
    %331 = vmatprep.subr.bf16.mxu0 0
    %332 = vmatpush1.bf16.msra.mxu0 0
    %333 = vmatprep.mubr.bf16.mxu0 0
    %334 = vmatmul.mubr.bf16.gmra.mrb[0].mxu0 %v299
    %v335 = vpop.f32.mrb[0].mxu0
    %v336 = vadd.f32 %v281, %v335
    %v337 = vpop.f32.mrb[0].mxu0
    %v338 = vpop.f32.mrb[0].mxu0
    %v339 = vpop.f32.mrb[0].mxu0
    %340 = vdwg.mxu0
    %341 = vst [vmem:[#allocation3] sm:$0xff] %v336
    %v342 = vld [vmem:[#allocation2 + $0x8] sm:$0xff]
    %343 = vmatprep.subr.bf16.mxu0 0
    %344 = vmatpush1.bf16.msra.mxu0 %v203
    %345 = vmatprep.subr.bf16.mxu0 0
    %346 = vmatpush1.bf16.msra.mxu0 %v204
    %347 = vmatprep.subr.bf16.mxu0 0
    %348 = vmatpush1.bf16.msra.mxu0 0
    %349 = vmatprep.subr.bf16.mxu0 0
    %350 = vmatpush1.bf16.msra.mxu0 0
    %351 = vmatprep.subr.bf16.mxu0 0
    %352 = vmatpush1.bf16.msra.mxu0 0
    %353 = vmatprep.subr.bf16.mxu0 0
    %354 = vmatpush1.bf16.msra.mxu0 0
    %355 = vmatprep.subr.bf16.mxu0 0
    %356 = vmatpush1.bf16.msra.mxu0 0
    %357 = vmatprep.subr.bf16.mxu0 0
    %358 = vmatpush1.bf16.msra.mxu0 0
    %359 = vmatprep.subr.bf16.mxu0 0
    %360 = vmatpush1.bf16.msra.mxu0 0
    %361 = vmatprep.subr.bf16.mxu0 0
    %362 = vmatpush1.bf16.msra.mxu0 0
    %363 = vmatprep.subr.bf16.mxu0 0
    %364 = vmatpush1.bf16.msra.mxu0 0
    %365 = vmatprep.subr.bf16.mxu0 0
    %366 = vmatpush1.bf16.msra.mxu0 0
    %367 = vmatprep.subr.bf16.mxu0 0
    %368 = vmatpush1.bf16.msra.mxu0 0
    %369 = vmatprep.subr.bf16.mxu0 0
    %370 = vmatpush1.bf16.msra.mxu0 0
    %371 = vmatprep.subr.bf16.mxu0 0
    %372 = vmatpush1.bf16.msra.mxu0 0
    %373 = vmatprep.subr.bf16.mxu0 0
    %374 = vmatpush1.bf16.msra.mxu0 0
    %375 = vmatprep.mubr.bf16.mxu0 0
    %376 = vmatmul.mubr.bf16.gmra.mrb[0].mxu0 %v299
    %v377 = vpop.f32.mrb[0].mxu0
    %v378 = vadd.f32 0.0, %v377
    %v379 = vpop.f32.mrb[0].mxu0
    %v380 = vpop.f32.mrb[0].mxu0
    %v381 = vpop.f32.mrb[0].mxu0
    %382 = vdwg.mxu0
    %v383 = vadd.f32 %v342, %v378
    %v384 = vxor.u32 %v383, 2147483648
    %v385 = vmul.f32 %v384, 1.442695
    %v386 = vpow.pop %v385
    %v387 = vadd.f32 %v386, 1.0
    %v388 = vrcp.pop %v387
    %v389 = vmul.f32 1.0, %v388
    %v390 = vtanh.pop %v383
    %v391 = vmul.f32 %v389, %v269
    %393 = vrot.lane.b32.xlu0 %v390, 32
    %v394 = vpop.permute.xlu0 %393
    %v396 = vmul.f32 %v389, %v394
    %398 = vrot.lane.b32.xlu0 %v396, 32
    %v399 = vpop.permute.xlu0 %398
    %v401 = vadd.f32 %v391, %v399
    %v402 = vtanh.pop %v401
    %404 = vrot.lane.b32.xlu0 %v402, 32
    %v405 = vpop.permute.xlu0 %404
    %v407 = vmul.f32 %v389, %v405
    %v408 = vpack.c.bf16 %v407, %v407
    %410 = vrot.lane.b32.xlu0 %v408, 64
    %v411 = vpop.permute.xlu0 %410
    %v413 = vsel %vm207, %v411, 0
    %415 = vmatprep.subr.bf16.mxu0 0
    %416 = vmatpush1.bf16.msra.mxu0 %v294
    %417 = vmatprep.subr.bf16.mxu0 0
    %418 = vmatpush1.bf16.msra.mxu0 %v295
    %419 = vmatprep.subr.bf16.mxu0 0
    %420 = vmatpush1.bf16.msra.mxu0 0
    %421 = vmatprep.subr.bf16.mxu0 0
    %422 = vmatpush1.bf16.msra.mxu0 0
    %423 = vmatprep.subr.bf16.mxu0 0
    %424 = vmatpush1.bf16.msra.mxu0 0
    %425 = vmatprep.subr.bf16.mxu0 0
    %426 = vmatpush1.bf16.msra.mxu0 0
    %427 = vmatprep.subr.bf16.mxu0 0
    %428 = vmatpush1.bf16.msra.mxu0 0
    %429 = vmatprep.subr.bf16.mxu0 0
    %430 = vmatpush1.bf16.msra.mxu0 0
    %431 = vmatprep.subr.bf16.mxu0 0
    %432 = vmatpush1.bf16.msra.mxu0 0
    %433 = vmatprep.subr.bf16.mxu0 0
    %434 = vmatpush1.bf16.msra.mxu0 0
    %435 = vmatprep.subr.bf16.mxu0 0
    %436 = vmatpush1.bf16.msra.mxu0 0
    %437 = vmatprep.subr.bf16.mxu0 0
    %438 = vmatpush1.bf16.msra.mxu0 0
    %439 = vmatprep.subr.bf16.mxu0 0
    %440 = vmatpush1.bf16.msra.mxu0 0
    %441 = vmatprep.subr.bf16.mxu0 0
    %442 = vmatpush1.bf16.msra.mxu0 0
    %443 = vmatprep.subr.bf16.mxu0 0
    %444 = vmatpush1.bf16.msra.mxu0 0
    %445 = vmatprep.subr.bf16.mxu0 0
    %446 = vmatpush1.bf16.msra.mxu0 0
    %447 = vmatprep.mubr.bf16.mxu0 0
    %448 = vmatmul.mubr.bf16.gmra.mrb[0].mxu0 %v413
    %v449 = vpop.f32.mrb[0].mxu0
    %v450 = vadd.f32 %v281, %v449
    %v451 = vpop.f32.mrb[0].mxu0
    %v452 = vpop.f32.mrb[0].mxu0
    %v453 = vpop.f32.mrb[0].mxu0
    %454 = vdwg.mxu0
    %455 = vst [vmem:[#allocation3 + $0x8] sm:$0xff] %v450
    %v456 = vld [vmem:[#allocation2 + $0x10] sm:$0xff]
    %457 = vmatprep.subr.bf16.mxu0 0
    %458 = vmatpush1.bf16.msra.mxu0 %v203
    %459 = vmatprep.subr.bf16.mxu0 0
    %460 = vmatpush1.bf16.msra.mxu0 %v204
    %461 = vmatprep.subr.bf16.mxu0 0
    %462 = vmatpush1.bf16.msra.mxu0 0
    %463 = vmatprep.subr.bf16.mxu0 0
    %464 = vmatpush1.bf16.msra.mxu0 0
    %465 = vmatprep.subr.bf16.mxu0 0
    %466 = vmatpush1.bf16.msra.mxu0 0
    %467 = vmatprep.subr.bf16.mxu0 0
    %468 = vmatpush1.bf16.msra.mxu0 0
    %469 = vmatprep.subr.bf16.mxu0 0
    %470 = vmatpush1.bf16.msra.mxu0 0
    %471 = vmatprep.subr.bf16.mxu0 0
    %472 = vmatpush1.bf16.msra.mxu0 0
    %473 = vmatprep.subr.bf16.mxu0 0
    %474 = vmatpush1.bf16.msra.mxu0 0
    %475 = vmatprep.subr.bf16.mxu0 0
    %476 = vmatpush1.bf16.msra.mxu0 0
    %477 = vmatprep.subr.bf16.mxu0 0
    %478 = vmatpush1.bf16.msra.mxu0 0
    %479 = vmatprep.subr.bf16.mxu0 0
    %480 = vmatpush1.bf16.msra.mxu0 0
    %481 = vmatprep.subr.bf16.mxu0 0
    %482 = vmatpush1.bf16.msra.mxu0 0
    %483 = vmatprep.subr.bf16.mxu0 0
    %484 = vmatpush1.bf16.msra.mxu0 0
    %485 = vmatprep.subr.bf16.mxu0 0
    %486 = vmatpush1.bf16.msra.mxu0 0
    %487 = vmatprep.subr.bf16.mxu0 0
    %488 = vmatpush1.bf16.msra.mxu0 0
    %489 = vmatprep.mubr.bf16.mxu0 0
    %490 = vmatmul.mubr.bf16.gmra.mrb[0].mxu0 %v413
    %v491 = vpop.f32.mrb[0].mxu0
    %v492 = vadd.f32 0.0, %v491
    %v493 = vpop.f32.mrb[0].mxu0
    %v494 = vpop.f32.mrb[0].mxu0
    %v495 = vpop.f32.mrb[0].mxu0
    %496 = vdwg.mxu0
    %v497 = vadd.f32 %v456, %v492
    %v498 = vxor.u32 %v497, 2147483648
    %v499 = vmul.f32 %v498, 1.442695
    %v500 = vpow.pop %v499
    %v501 = vadd.f32 %v500, 1.0
    %v502 = vrcp.pop %v501
    %v503 = vmul.f32 1.0, %v502
    %v504 = vtanh.pop %v497
    %v505 = vmul.f32 %v503, %v401
    %507 = vrot.lane.b32.xlu0 %v504, 32
    %v508 = vpop.permute.xlu0 %507
    %v510 = vmul.f32 %v503, %v508
    %512 = vrot.lane.b32.xlu0 %v510, 32
    %v513 = vpop.permute.xlu0 %512
    %v515 = vadd.f32 %v505, %v513
    %v516 = vtanh.pop %v515
    %518 = vrot.lane.b32.xlu0 %v516, 32
    %v519 = vpop.permute.xlu0 %518
    %v521 = vmul.f32 %v503, %v519
    %v522 = vpack.c.bf16 %v521, %v521
    %524 = vrot.lane.b32.xlu0 %v522, 64
    %v525 = vpop.permute.xlu0 %524
    %v527 = vsel %vm207, %v525, 0
    %529 = vmatprep.subr.bf16.mxu0 0
    %530 = vmatpush1.bf16.msra.mxu0 %v294
    %531 = vmatprep.subr.bf16.mxu0 0
    %532 = vmatpush1.bf16.msra.mxu0 %v295
    %533 = vmatprep.subr.bf16.mxu0 0
    %534 = vmatpush1.bf16.msra.mxu0 0
    %535 = vmatprep.subr.bf16.mxu0 0
    %536 = vmatpush1.bf16.msra.mxu0 0
    %537 = vmatprep.subr.bf16.mxu0 0
    %538 = vmatpush1.bf16.msra.mxu0 0
    %539 = vmatprep.subr.bf16.mxu0 0
    %540 = vmatpush1.bf16.msra.mxu0 0
    %541 = vmatprep.subr.bf16.mxu0 0
    %542 = vmatpush1.bf16.msra.mxu0 0
    %543 = vmatprep.subr.bf16.mxu0 0
    %544 = vmatpush1.bf16.msra.mxu0 0
    %545 = vmatprep.subr.bf16.mxu0 0
    %546 = vmatpush1.bf16.msra.mxu0 0
    %547 = vmatprep.subr.bf16.mxu0 0
    %548 = vmatpush1.bf16.msra.mxu0 0
    %549 = vmatprep.subr.bf16.mxu0 0
    %550 = vmatpush1.bf16.msra.mxu0 0
    %551 = vmatprep.subr.bf16.mxu0 0
    %552 = vmatpush1.bf16.msra.mxu0 0
    %553 = vmatprep.subr.bf16.mxu0 0
    %554 = vmatpush1.bf16.msra.mxu0 0
    %555 = vmatprep.subr.bf16.mxu0 0
    %556 = vmatpush1.bf16.msra.mxu0 0
    %557 = vmatprep.subr.bf16.mxu0 0
    %558 = vmatpush1.bf16.msra.mxu0 0
    %559 = vmatprep.subr.bf16.mxu0 0
    %560 = vmatpush1.bf16.msra.mxu0 0
    %561 = vmatprep.mubr.bf16.mxu0 0
    %562 = vmatmul.mubr.bf16.gmra.mrb[0].mxu0 %v527
    %v563 = vpop.f32.mrb[0].mxu0
    %v564 = vadd.f32 %v281, %v563
    %v565 = vpop.f32.mrb[0].mxu0
    %v566 = vpop.f32.mrb[0].mxu0
    %v567 = vpop.f32.mrb[0].mxu0
    %568 = vdwg.mxu0
    %569 = vst [vmem:[#allocation3 + $0x10] sm:$0xff] %v564
    %v570 = vld [vmem:[#allocation2 + $0x18] sm:$0xff]
    %571 = vmatprep.subr.bf16.mxu0 0
    %572 = vmatpush1.bf16.msra.mxu0 %v203
    %573 = vmatprep.subr.bf16.mxu0 0
    %574 = vmatpush1.bf16.msra.mxu0 %v204
    %575 = vmatprep.subr.bf16.mxu0 0
    %576 = vmatpush1.bf16.msra.mxu0 0
    %577 = vmatprep.subr.bf16.mxu0 0
    %578 = vmatpush1.bf16.msra.mxu0 0
    %579 = vmatprep.subr.bf16.mxu0 0
    %580 = vmatpush1.bf16.msra.mxu0 0
    %581 = vmatprep.subr.bf16.mxu0 0
    %582 = vmatpush1.bf16.msra.mxu0 0
    %583 = vmatprep.subr.bf16.mxu0 0
    %584 = vmatpush1.bf16.msra.mxu0 0
    %585 = vmatprep.subr.bf16.mxu0 0
    %586 = vmatpush1.bf16.msra.mxu0 0
    %587 = vmatprep.subr.bf16.mxu0 0
    %588 = vmatpush1.bf16.msra.mxu0 0
    %589 = vmatprep.subr.bf16.mxu0 0
    %590 = vmatpush1.bf16.msra.mxu0 0
    %591 = vmatprep.subr.bf16.mxu0 0
    %592 = vmatpush1.bf16.msra.mxu0 0
    %593 = vmatprep.subr.bf16.mxu0 0
    %594 = vmatpush1.bf16.msra.mxu0 0
    %595 = vmatprep.subr.bf16.mxu0 0
    %596 = vmatpush1.bf16.msra.mxu0 0
    %597 = vmatprep.subr.bf16.mxu0 0
    %598 = vmatpush1.bf16.msra.mxu0 0
    %599 = vmatprep.subr.bf16.mxu0 0
    %600 = vmatpush1.bf16.msra.mxu0 0
    %601 = vmatprep.subr.bf16.mxu0 0
    %602 = vmatpush1.bf16.msra.mxu0 0
    %603 = vmatprep.mubr.bf16.mxu0 0
    %604 = vmatmul.mubr.bf16.gmra.mrb[0].mxu0 %v527
    %v605 = vpop.f32.mrb[0].mxu0
    %v606 = vadd.f32 0.0, %v605
    %v607 = vpop.f32.mrb[0].mxu0
    %v608 = vpop.f32.mrb[0].mxu0
    %v609 = vpop.f32.mrb[0].mxu0
    %610 = vdwg.mxu0
    %v611 = vadd.f32 %v570, %v606
    %v612 = vxor.u32 %v611, 2147483648
    %v613 = vmul.f32 %v612, 1.442695
    %v614 = vpow.pop %v613
    %v615 = vadd.f32 %v614, 1.0
    %v616 = vrcp.pop %v615
    %v617 = vmul.f32 1.0, %v616
    %v618 = vtanh.pop %v611
    %v619 = vmul.f32 %v617, %v515
    %621 = vrot.lane.b32.xlu0 %v618, 32
    %v622 = vpop.permute.xlu0 %621
    %v624 = vmul.f32 %v617, %v622
    %626 = vrot.lane.b32.xlu0 %v624, 32
    %v627 = vpop.permute.xlu0 %626
    %v629 = vadd.f32 %v619, %v627
    %v630 = vtanh.pop %v629
    %632 = vrot.lane.b32.xlu0 %v630, 32
    %v633 = vpop.permute.xlu0 %632
    %v635 = vmul.f32 %v617, %v633
    %v636 = vpack.c.bf16 %v635, %v635
    %638 = vrot.lane.b32.xlu0 %v636, 64
    %v639 = vpop.permute.xlu0 %638
    %v641 = vsel %vm207, %v639, 0
    %643 = vmatprep.subr.bf16.mxu0 0
    %644 = vmatpush1.bf16.msra.mxu0 %v294
    %645 = vmatprep.subr.bf16.mxu0 0
    %646 = vmatpush1.bf16.msra.mxu0 %v295
    %647 = vmatprep.subr.bf16.mxu0 0
    %648 = vmatpush1.bf16.msra.mxu0 0
    %649 = vmatprep.subr.bf16.mxu0 0
    %650 = vmatpush1.bf16.msra.mxu0 0
    %651 = vmatprep.subr.bf16.mxu0 0
    %652 = vmatpush1.bf16.msra.mxu0 0
    %653 = vmatprep.subr.bf16.mxu0 0
    %654 = vmatpush1.bf16.msra.mxu0 0
    %655 = vmatprep.subr.bf16.mxu0 0
    %656 = vmatpush1.bf16.msra.mxu0 0
    %657 = vmatprep.subr.bf16.mxu0 0
    %658 = vmatpush1.bf16.msra.mxu0 0
    %659 = vmatprep.subr.bf16.mxu0 0
    %660 = vmatpush1.bf16.msra.mxu0 0
    %661 = vmatprep.subr.bf16.mxu0 0
    %662 = vmatpush1.bf16.msra.mxu0 0
    %663 = vmatprep.subr.bf16.mxu0 0
    %664 = vmatpush1.bf16.msra.mxu0 0
    %665 = vmatprep.subr.bf16.mxu0 0
    %666 = vmatpush1.bf16.msra.mxu0 0
    %667 = vmatprep.subr.bf16.mxu0 0
    %668 = vmatpush1.bf16.msra.mxu0 0
    %669 = vmatprep.subr.bf16.mxu0 0
    %670 = vmatpush1.bf16.msra.mxu0 0
    %671 = vmatprep.subr.bf16.mxu0 0
    %672 = vmatpush1.bf16.msra.mxu0 0
    %673 = vmatprep.subr.bf16.mxu0 0
    %674 = vmatpush1.bf16.msra.mxu0 0
    %675 = vmatprep.mubr.bf16.mxu0 0
    %676 = vmatmul.mubr.bf16.gmra.mrb[0].mxu0 %v641
    %v677 = vpop.f32.mrb[0].mxu0
    %v678 = vadd.f32 %v281, %v677
    %v679 = vpop.f32.mrb[0].mxu0
    %v680 = vpop.f32.mrb[0].mxu0
    %v681 = vpop.f32.mrb[0].mxu0
    %682 = vdwg.mxu0
    %683 = vst [vmem:[#allocation3 + $0x18] sm:$0xff] %v678
    %v684 = vld [vmem:[#allocation2 + $0x20] sm:$0xff]
    %685 = vmatprep.subr.bf16.mxu0 0
    %686 = vmatpush1.bf16.msra.mxu0 %v203
    %687 = vmatprep.subr.bf16.mxu0 0
    %688 = vmatpush1.bf16.msra.mxu0 %v204
    %689 = vmatprep.subr.bf16.mxu0 0
    %690 = vmatpush1.bf16.msra.mxu0 0
    %691 = vmatprep.subr.bf16.mxu0 0
    %692 = vmatpush1.bf16.msra.mxu0 0
    %693 = vmatprep.subr.bf16.mxu0 0
    %694 = vmatpush1.bf16.msra.mxu0 0
    %695 = vmatprep.subr.bf16.mxu0 0
    %696 = vmatpush1.bf16.msra.mxu0 0
    %697 = vmatprep.subr.bf16.mxu0 0
    %698 = vmatpush1.bf16.msra.mxu0 0
    %699 = vmatprep.subr.bf16.mxu0 0
    %700 = vmatpush1.bf16.msra.mxu0 0
    %701 = vmatprep.subr.bf16.mxu0 0
    %702 = vmatpush1.bf16.msra.mxu0 0
    %703 = vmatprep.subr.bf16.mxu0 0
    %704 = vmatpush1.bf16.msra.mxu0 0
    %705 = vmatprep.subr.bf16.mxu0 0
    %706 = vmatpush1.bf16.msra.mxu0 0
    %707 = vmatprep.subr.bf16.mxu0 0
    %708 = vmatpush1.bf16.msra.mxu0 0
    %709 = vmatprep.subr.bf16.mxu0 0
    %710 = vmatpush1.bf16.msra.mxu0 0
    %711 = vmatprep.subr.bf16.mxu0 0
    %712 = vmatpush1.bf16.msra.mxu0 0
    %713 = vmatprep.subr.bf16.mxu0 0
    %714 = vmatpush1.bf16.msra.mxu0 0
    %715 = vmatprep.subr.bf16.mxu0 0
    %716 = vmatpush1.bf16.msra.mxu0 0
    %717 = vmatprep.mubr.bf16.mxu0 0
    %718 = vmatmul.mubr.bf16.gmra.mrb[0].mxu0 %v641
    %v719 = vpop.f32.mrb[0].mxu0
    %v720 = vadd.f32 0.0, %v719
    %v721 = vpop.f32.mrb[0].mxu0
    %v722 = vpop.f32.mrb[0].mxu0
    %v723 = vpop.f32.mrb[0].mxu0
    %724 = vdwg.mxu0
    %v725 = vadd.f32 %v684, %v720
    %v726 = vxor.u32 %v725, 2147483648
    %v727 = vmul.f32 %v726, 1.442695
    %v728 = vpow.pop %v727
    %v729 = vadd.f32 %v728, 1.0
    %v730 = vrcp.pop %v729
    %v731 = vmul.f32 1.0, %v730
    %v732 = vtanh.pop %v725
    %v733 = vmul.f32 %v731, %v629
    %735 = vrot.lane.b32.xlu0 %v732, 32
    %v736 = vpop.permute.xlu0 %735
    %v738 = vmul.f32 %v731, %v736
    %740 = vrot.lane.b32.xlu0 %v738, 32
    %v741 = vpop.permute.xlu0 %740
    %v743 = vadd.f32 %v733, %v741
    %v744 = vtanh.pop %v743
    %746 = vrot.lane.b32.xlu0 %v744, 32
    %v747 = vpop.permute.xlu0 %746
    %v749 = vmul.f32 %v731, %v747
    %v750 = vpack.c.bf16 %v749, %v749
    %752 = vrot.lane.b32.xlu0 %v750, 64
    %v753 = vpop.permute.xlu0 %752
    %v755 = vsel %vm207, %v753, 0
    %757 = vmatprep.subr.bf16.mxu0 0
    %758 = vmatpush1.bf16.msra.mxu0 %v294
    %759 = vmatprep.subr.bf16.mxu0 0
    %760 = vmatpush1.bf16.msra.mxu0 %v295
    %761 = vmatprep.subr.bf16.mxu0 0
    %762 = vmatpush1.bf16.msra.mxu0 0
    %763 = vmatprep.subr.bf16.mxu0 0
    %764 = vmatpush1.bf16.msra.mxu0 0
    %765 = vmatprep.subr.bf16.mxu0 0
    %766 = vmatpush1.bf16.msra.mxu0 0
    %767 = vmatprep.subr.bf16.mxu0 0
    %768 = vmatpush1.bf16.msra.mxu0 0
    %769 = vmatprep.subr.bf16.mxu0 0
    %770 = vmatpush1.bf16.msra.mxu0 0
    %771 = vmatprep.subr.bf16.mxu0 0
    %772 = vmatpush1.bf16.msra.mxu0 0
    %773 = vmatprep.subr.bf16.mxu0 0
    %774 = vmatpush1.bf16.msra.mxu0 0
    %775 = vmatprep.subr.bf16.mxu0 0
    %776 = vmatpush1.bf16.msra.mxu0 0
    %777 = vmatprep.subr.bf16.mxu0 0
    %778 = vmatpush1.bf16.msra.mxu0 0
    %779 = vmatprep.subr.bf16.mxu0 0
    %780 = vmatpush1.bf16.msra.mxu0 0
    %781 = vmatprep.subr.bf16.mxu0 0
    %782 = vmatpush1.bf16.msra.mxu0 0
    %783 = vmatprep.subr.bf16.mxu0 0
    %784 = vmatpush1.bf16.msra.mxu0 0
    %785 = vmatprep.subr.bf16.mxu0 0
    %786 = vmatpush1.bf16.msra.mxu0 0
    %787 = vmatprep.subr.bf16.mxu0 0
    %788 = vmatpush1.bf16.msra.mxu0 0
    %789 = vmatprep.mubr.bf16.mxu0 0
    %790 = vmatmul.mubr.bf16.gmra.mrb[0].mxu0 %v755
    %v791 = vpop.f32.mrb[0].mxu0
    %v792 = vadd.f32 %v281, %v791
    %v793 = vpop.f32.mrb[0].mxu0
    %v794 = vpop.f32.mrb[0].mxu0
    %v795 = vpop.f32.mrb[0].mxu0
    %796 = vdwg.mxu0
    %797 = vst [vmem:[#allocation3 + $0x20] sm:$0xff] %v792
    %v798 = vld [vmem:[#allocation2 + $0x28] sm:$0xff]
    %799 = vmatprep.subr.bf16.mxu0 0
    %800 = vmatpush1.bf16.msra.mxu0 %v203
    %801 = vmatprep.subr.bf16.mxu0 0
    %802 = vmatpush1.bf16.msra.mxu0 %v204
    %803 = vmatprep.subr.bf16.mxu0 0
    %804 = vmatpush1.bf16.msra.mxu0 0
    %805 = vmatprep.subr.bf16.mxu0 0
    %806 = vmatpush1.bf16.msra.mxu0 0
    %807 = vmatprep.subr.bf16.mxu0 0
    %808 = vmatpush1.bf16.msra.mxu0 0
    %809 = vmatprep.subr.bf16.mxu0 0
    %810 = vmatpush1.bf16.msra.mxu0 0
    %811 = vmatprep.subr.bf16.mxu0 0
    %812 = vmatpush1.bf16.msra.mxu0 0
    %813 = vmatprep.subr.bf16.mxu0 0
    %814 = vmatpush1.bf16.msra.mxu0 0
    %815 = vmatprep.subr.bf16.mxu0 0
    %816 = vmatpush1.bf16.msra.mxu0 0
    %817 = vmatprep.subr.bf16.mxu0 0
    %818 = vmatpush1.bf16.msra.mxu0 0
    %819 = vmatprep.subr.bf16.mxu0 0
    %820 = vmatpush1.bf16.msra.mxu0 0
    %821 = vmatprep.subr.bf16.mxu0 0
    %822 = vmatpush1.bf16.msra.mxu0 0
    %823 = vmatprep.subr.bf16.mxu0 0
    %824 = vmatpush1.bf16.msra.mxu0 0
    %825 = vmatprep.subr.bf16.mxu0 0
    %826 = vmatpush1.bf16.msra.mxu0 0
    %827 = vmatprep.subr.bf16.mxu0 0
    %828 = vmatpush1.bf16.msra.mxu0 0
    %829 = vmatprep.subr.bf16.mxu0 0
    %830 = vmatpush1.bf16.msra.mxu0 0
    %831 = vmatprep.mubr.bf16.mxu0 0
    %832 = vmatmul.mubr.bf16.gmra.mrb[0].mxu0 %v755
    %v833 = vpop.f32.mrb[0].mxu0
    %v834 = vadd.f32 0.0, %v833
    %v835 = vpop.f32.mrb[0].mxu0
    %v836 = vpop.f32.mrb[0].mxu0
    %v837 = vpop.f32.mrb[0].mxu0
    %838 = vdwg.mxu0
    %v839 = vadd.f32 %v798, %v834
    %v840 = vxor.u32 %v839, 2147483648
    %v841 = vmul.f32 %v840, 1.442695
    %v842 = vpow.pop %v841
    %v843 = vadd.f32 %v842, 1.0
    %v844 = vrcp.pop %v843
    %v845 = vmul.f32 1.0, %v844
    %v846 = vtanh.pop %v839
    %v847 = vmul.f32 %v845, %v743
    %849 = vrot.lane.b32.xlu0 %v846, 32
    %v850 = vpop.permute.xlu0 %849
    %v852 = vmul.f32 %v845, %v850
    %854 = vrot.lane.b32.xlu0 %v852, 32
    %v855 = vpop.permute.xlu0 %854
    %v857 = vadd.f32 %v847, %v855
    %v858 = vtanh.pop %v857
    %860 = vrot.lane.b32.xlu0 %v858, 32
    %v861 = vpop.permute.xlu0 %860
    %v863 = vmul.f32 %v845, %v861
    %v864 = vpack.c.bf16 %v863, %v863
    %866 = vrot.lane.b32.xlu0 %v864, 64
    %v867 = vpop.permute.xlu0 %866
    %v869 = vsel %vm207, %v867, 0
    %871 = vmatprep.subr.bf16.mxu0 0
    %872 = vmatpush1.bf16.msra.mxu0 %v294
    %873 = vmatprep.subr.bf16.mxu0 0
    %874 = vmatpush1.bf16.msra.mxu0 %v295
    %875 = vmatprep.subr.bf16.mxu0 0
    %876 = vmatpush1.bf16.msra.mxu0 0
    %877 = vmatprep.subr.bf16.mxu0 0
    %878 = vmatpush1.bf16.msra.mxu0 0
    %879 = vmatprep.subr.bf16.mxu0 0
    %880 = vmatpush1.bf16.msra.mxu0 0
    %881 = vmatprep.subr.bf16.mxu0 0
    %882 = vmatpush1.bf16.msra.mxu0 0
    %883 = vmatprep.subr.bf16.mxu0 0
    %884 = vmatpush1.bf16.msra.mxu0 0
    %885 = vmatprep.subr.bf16.mxu0 0
    %886 = vmatpush1.bf16.msra.mxu0 0
    %887 = vmatprep.subr.bf16.mxu0 0
    %888 = vmatpush1.bf16.msra.mxu0 0
    %889 = vmatprep.subr.bf16.mxu0 0
    %890 = vmatpush1.bf16.msra.mxu0 0
    %891 = vmatprep.subr.bf16.mxu0 0
    %892 = vmatpush1.bf16.msra.mxu0 0
    %893 = vmatprep.subr.bf16.mxu0 0
    %894 = vmatpush1.bf16.msra.mxu0 0
    %895 = vmatprep.subr.bf16.mxu0 0
    %896 = vmatpush1.bf16.msra.mxu0 0
    %897 = vmatprep.subr.bf16.mxu0 0
    %898 = vmatpush1.bf16.msra.mxu0 0
    %899 = vmatprep.subr.bf16.mxu0 0
    %900 = vmatpush1.bf16.msra.mxu0 0
    %901 = vmatprep.subr.bf16.mxu0 0
    %902 = vmatpush1.bf16.msra.mxu0 0
    %903 = vmatprep.mubr.bf16.mxu0 0
    %904 = vmatmul.mubr.bf16.gmra.mrb[0].mxu0 %v869
    %v905 = vpop.f32.mrb[0].mxu0
    %v906 = vadd.f32 %v281, %v905
    %v907 = vpop.f32.mrb[0].mxu0
    %v908 = vpop.f32.mrb[0].mxu0
    %v909 = vpop.f32.mrb[0].mxu0
    %910 = vdwg.mxu0
    %911 = vst [vmem:[#allocation3 + $0x28] sm:$0xff] %v906
    %913 = vrot.lane.b32.xlu0 %v863, 64
    %v914 = vpop.permute.xlu0 %913
    %916 = vst.msk [vmem:[#allocation14] sm:$0xff] %vm207, %v914
    %v917 = vld [vmem:[#allocation11] sm:$0xf]
    %v918 = vld [vmem:[#allocation11 + $0x4] sm:$0xf]
    %v919 = vld [vmem:[#allocation11 + $0x8] sm:$0xf]
    %v920 = vld [vmem:[#allocation11 + $0xc] sm:$0xf]
    %v921 = vld [vmem:[#allocation3] sm:$0xff]
    %v926 = vunpack.c.l.b16 %v917
    %v927 = vunpack.c.l.b16 %v918
    %v928 = vunpack.c.l.b16 %v919
    %v929 = vunpack.c.l.b16 %v920
    %v930 = vpack.c.b16 %v927, %v926
    %v931 = vpack.c.b16 %v929, %v928
    %934 = vmatprep.subr.bf16.mxu0 0
    %935 = vmatpush1.bf16.msra.mxu0 %v930
    %936 = vmatprep.subr.bf16.mxu0 0
    %937 = vmatpush1.bf16.msra.mxu0 %v931
    %938 = vmatprep.subr.bf16.mxu0 0
    %939 = vmatpush1.bf16.msra.mxu0 0
    %940 = vmatprep.subr.bf16.mxu0 0
    %941 = vmatpush1.bf16.msra.mxu0 0
    %942 = vmatprep.subr.bf16.mxu0 0
    %943 = vmatpush1.bf16.msra.mxu0 0
    %944 = vmatprep.subr.bf16.mxu0 0
    %945 = vmatpush1.bf16.msra.mxu0 0
    %946 = vmatprep.subr.bf16.mxu0 0
    %947 = vmatpush1.bf16.msra.mxu0 0
    %948 = vmatprep.subr.bf16.mxu0 0
    %949 = vmatpush1.bf16.msra.mxu0 0
    %950 = vmatprep.subr.bf16.mxu0 0
    %951 = vmatpush1.bf16.msra.mxu0 0
    %952 = vmatprep.subr.bf16.mxu0 0
    %953 = vmatpush1.bf16.msra.mxu0 0
    %954 = vmatprep.subr.bf16.mxu0 0
    %955 = vmatpush1.bf16.msra.mxu0 0
    %956 = vmatprep.subr.bf16.mxu0 0
    %957 = vmatpush1.bf16.msra.mxu0 0
    %958 = vmatprep.subr.bf16.mxu0 0
    %959 = vmatpush1.bf16.msra.mxu0 0
    %960 = vmatprep.subr.bf16.mxu0 0
    %961 = vmatpush1.bf16.msra.mxu0 0
    %962 = vmatprep.subr.bf16.mxu0 0
    %963 = vmatpush1.bf16.msra.mxu0 0
    %964 = vmatprep.subr.bf16.mxu0 0
    %965 = vmatpush1.bf16.msra.mxu0 0
    %966 = vmatprep.mubr.bf16.mxu0 0
    %967 = vmatmul.mubr.bf16.gmra.mrb[0].mxu0 %v209
    %v968 = vpop.f32.mrb[0].mxu0
    %v969 = vadd.f32 0.0, %v968
    %v970 = vpop.f32.mrb[0].mxu0
    %v971 = vpop.f32.mrb[0].mxu0
    %v972 = vpop.f32.mrb[0].mxu0
    %973 = vdwg.mxu0
    %v974 = vadd.f32 %v921, %v969
    %v975 = vxor.u32 %v974, 2147483648
    %v976 = vmul.f32 %v975, 1.442695
    %v977 = vpow.pop %v976
    %v978 = vadd.f32 %v977, 1.0
    %v979 = vrcp.pop %v978
    %v980 = vmul.f32 1.0, %v979
    %v981 = vtanh.pop %v974
    %v982 = vmul.f32 %v980, 0.0
    %984 = vrot.lane.b32.xlu0 %v981, 32
    %v985 = vpop.permute.xlu0 %984
    %v987 = vmul.f32 %v980, %v985
    %989 = vrot.lane.b32.xlu0 %v987, 32
    %v990 = vpop.permute.xlu0 %989
    %v992 = vadd.f32 %v982, %v990
    %v993 = vtanh.pop %v992
    %995 = vrot.lane.b32.xlu0 %v993, 32
    %v996 = vpop.permute.xlu0 %995
    %v998 = vmul.f32 %v980, %v996
    %1000 = vrot.lane.b32.xlu0 %v998, 64
    %v1001 = vpop.permute.xlu0 %1000
    %vm1003 = vcmask 261127
    %1004 = vst.msk [vmem:[#allocation4 - $0x7] sm:$0x80] %vm1003, %v1001
    %v1005 = vld [vmem:[#allocation3 + $0x8] sm:$0xff]
    %v1006 = vpack.c.bf16 %v998, %v998
    %1008 = vrot.lane.b32.xlu0 %v1006, 64
    %v1009 = vpop.permute.xlu0 %1008
    %v1011 = vsel %vm207, %v1009, 0
    %1013 = vmatprep.subr.bf16.mxu0 0
    %1014 = vmatpush1.bf16.msra.mxu0 %v930
    %1015 = vmatprep.subr.bf16.mxu0 0
    %1016 = vmatpush1.bf16.msra.mxu0 %v931
    %1017 = vmatprep.subr.bf16.mxu0 0
    %1018 = vmatpush1.bf16.msra.mxu0 0
    %1019 = vmatprep.subr.bf16.mxu0 0
    %1020 = vmatpush1.bf16.msra.mxu0 0
    %1021 = vmatprep.subr.bf16.mxu0 0
    %1022 = vmatpush1.bf16.msra.mxu0 0
    %1023 = vmatprep.subr.bf16.mxu0 0
    %1024 = vmatpush1.bf16.msra.mxu0 0
    %1025 = vmatprep.subr.bf16.mxu0 0
    %1026 = vmatpush1.bf16.msra.mxu0 0
    %1027 = vmatprep.subr.bf16.mxu0 0
    %1028 = vmatpush1.bf16.msra.mxu0 0
    %1029 = vmatprep.subr.bf16.mxu0 0
    %1030 = vmatpush1.bf16.msra.mxu0 0
    %1031 = vmatprep.subr.bf16.mxu0 0
    %1032 = vmatpush1.bf16.msra.mxu0 0
    %1033 = vmatprep.subr.bf16.mxu0 0
    %1034 = vmatpush1.bf16.msra.mxu0 0
    %1035 = vmatprep.subr.bf16.mxu0 0
    %1036 = vmatpush1.bf16.msra.mxu0 0
    %1037 = vmatprep.subr.bf16.mxu0 0
    %1038 = vmatpush1.bf16.msra.mxu0 0
    %1039 = vmatprep.subr.bf16.mxu0 0
    %1040 = vmatpush1.bf16.msra.mxu0 0
    %1041 = vmatprep.subr.bf16.mxu0 0
    %1042 = vmatpush1.bf16.msra.mxu0 0
    %1043 = vmatprep.subr.bf16.mxu0 0
    %1044 = vmatpush1.bf16.msra.mxu0 0
    %1045 = vmatprep.mubr.bf16.mxu0 0
    %1046 = vmatmul.mubr.bf16.gmra.mrb[0].mxu0 %v1011
    %v1047 = vpop.f32.mrb[0].mxu0
    %v1048 = vadd.f32 0.0, %v1047
    %v1049 = vpop.f32.mrb[0].mxu0
    %v1050 = vpop.f32.mrb[0].mxu0
    %v1051 = vpop.f32.mrb[0].mxu0
    %1052 = vdwg.mxu0
    %v1053 = vadd.f32 %v1005, %v1048
    %v1054 = vxor.u32 %v1053, 2147483648
    %v1055 = vmul.f32 %v1054, 1.442695
    %v1056 = vpow.pop %v1055
    %v1057 = vadd.f32 %v1056, 1.0
    %v1058 = vrcp.pop %v1057
    %v1059 = vmul.f32 1.0, %v1058
    %v1060 = vtanh.pop %v1053
    %v1061 = vmul.f32 %v1059, %v992
    %1063 = vrot.lane.b32.xlu0 %v1060, 32
    %v1064 = vpop.permute.xlu0 %1063
    %v1066 = vmul.f32 %v1059, %v1064
    %1068 = vrot.lane.b32.xlu0 %v1066, 32
    %v1069 = vpop.permute.xlu0 %1068
    %v1071 = vadd.f32 %v1061, %v1069
    %v1072 = vtanh.pop %v1071
    %1074 = vrot.lane.b32.xlu0 %v1072, 32
    %v1075 = vpop.permute.xlu0 %1074
    %v1077 = vmul.f32 %v1059, %v1075
    %1079 = vrot.lane.b32.xlu0 %v1077, 64
    %v1080 = vpop.permute.xlu0 %1079
    %1082 = vst.msk [vmem:[#allocation4 - $0x6] sm:$0x80] %vm1003, %v1080
    %v1083 = vld [vmem:[#allocation3 + $0x10] sm:$0xff]
    %v1084 = vpack.c.bf16 %v1077, %v1077
    %1086 = vrot.lane.b32.xlu0 %v1084, 64
    %v1087 = vpop.permute.xlu0 %1086
    %v1089 = vsel %vm207, %v1087, 0
    %1091 = vmatprep.subr.bf16.mxu0 0
    %1092 = vmatpush1.bf16.msra.mxu0 %v930
    %1093 = vmatprep.subr.bf16.mxu0 0
    %1094 = vmatpush1.bf16.msra.mxu0 %v931
    %1095 = vmatprep.subr.bf16.mxu0 0
    %1096 = vmatpush1.bf16.msra.mxu0 0
    %1097 = vmatprep.subr.bf16.mxu0 0
    %1098 = vmatpush1.bf16.msra.mxu0 0
    %1099 = vmatprep.subr.bf16.mxu0 0
    %1100 = vmatpush1.bf16.msra.mxu0 0
    %1101 = vmatprep.subr.bf16.mxu0 0
    %1102 = vmatpush1.bf16.msra.mxu0 0
    %1103 = vmatprep.subr.bf16.mxu0 0
    %1104 = vmatpush1.bf16.msra.mxu0 0
    %1105 = vmatprep.subr.bf16.mxu0 0
    %1106 = vmatpush1.bf16.msra.mxu0 0
    %1107 = vmatprep.subr.bf16.mxu0 0
    %1108 = vmatpush1.bf16.msra.mxu0 0
    %1109 = vmatprep.subr.bf16.mxu0 0
    %1110 = vmatpush1.bf16.msra.mxu0 0
    %1111 = vmatprep.subr.bf16.mxu0 0
    %1112 = vmatpush1.bf16.msra.mxu0 0
    %1113 = vmatprep.subr.bf16.mxu0 0
    %1114 = vmatpush1.bf16.msra.mxu0 0
    %1115 = vmatprep.subr.bf16.mxu0 0
    %1116 = vmatpush1.bf16.msra.mxu0 0
    %1117 = vmatprep.subr.bf16.mxu0 0
    %1118 = vmatpush1.bf16.msra.mxu0 0
    %1119 = vmatprep.subr.bf16.mxu0 0
    %1120 = vmatpush1.bf16.msra.mxu0 0
    %1121 = vmatprep.subr.bf16.mxu0 0
    %1122 = vmatpush1.bf16.msra.mxu0 0
    %1123 = vmatprep.mubr.bf16.mxu0 0
    %1124 = vmatmul.mubr.bf16.gmra.mrb[0].mxu0 %v1089
    %v1125 = vpop.f32.mrb[0].mxu0
    %v1126 = vadd.f32 0.0, %v1125
    %v1127 = vpop.f32.mrb[0].mxu0
    %v1128 = vpop.f32.mrb[0].mxu0
    %v1129 = vpop.f32.mrb[0].mxu0
    %1130 = vdwg.mxu0
    %v1131 = vadd.f32 %v1083, %v1126
    %v1132 = vxor.u32 %v1131, 2147483648
    %v1133 = vmul.f32 %v1132, 1.442695
    %v1134 = vpow.pop %v1133
    %v1135 = vadd.f32 %v1134, 1.0
    %v1136 = vrcp.pop %v1135
    %v1137 = vmul.f32 1.0, %v1136
    %v1138 = vtanh.pop %v1131
    %v1139 = vmul.f32 %v1137, %v1071
    %1141 = vrot.lane.b32.xlu0 %v1138, 32
    %v1142 = vpop.permute.xlu0 %1141
    %v1144 = vmul.f32 %v1137, %v1142
    %1146 = vrot.lane.b32.xlu0 %v1144, 32
    %v1147 = vpop.permute.xlu0 %1146
    %v1149 = vadd.f32 %v1139, %v1147
    %v1150 = vtanh.pop %v1149
    %1152 = vrot.lane.b32.xlu0 %v1150, 32
    %v1153 = vpop.permute.xlu0 %1152
    %v1155 = vmul.f32 %v1137, %v1153
    %1157 = vrot.lane.b32.xlu0 %v1155, 64
    %v1158 = vpop.permute.xlu0 %1157
    %1160 = vst.msk [vmem:[#allocation4 - $0x5] sm:$0x80] %vm1003, %v1158
    %v1161 = vld [vmem:[#allocation3 + $0x18] sm:$0xff]
    %v1162 = vpack.c.bf16 %v1155, %v1155
    %1164 = vrot.lane.b32.xlu0 %v1162, 64
    %v1165 = vpop.permute.xlu0 %1164
    %v1167 = vsel %vm207, %v1165, 0
    %1169 = vmatprep.subr.bf16.mxu0 0
    %1170 = vmatpush1.bf16.msra.mxu0 %v930
    %1171 = vmatprep.subr.bf16.mxu0 0
    %1172 = vmatpush1.bf16.msra.mxu0 %v931
    %1173 = vmatprep.subr.bf16.mxu0 0
    %1174 = vmatpush1.bf16.msra.mxu0 0
    %1175 = vmatprep.subr.bf16.mxu0 0
    %1176 = vmatpush1.bf16.msra.mxu0 0
    %1177 = vmatprep.subr.bf16.mxu0 0
    %1178 = vmatpush1.bf16.msra.mxu0 0
    %1179 = vmatprep.subr.bf16.mxu0 0
    %1180 = vmatpush1.bf16.msra.mxu0 0
    %1181 = vmatprep.subr.bf16.mxu0 0
    %1182 = vmatpush1.bf16.msra.mxu0 0
    %1183 = vmatprep.subr.bf16.mxu0 0
    %1184 = vmatpush1.bf16.msra.mxu0 0
    %1185 = vmatprep.subr.bf16.mxu0 0
    %1186 = vmatpush1.bf16.msra.mxu0 0
    %1187 = vmatprep.subr.bf16.mxu0 0
    %1188 = vmatpush1.bf16.msra.mxu0 0
    %1189 = vmatprep.subr.bf16.mxu0 0
    %1190 = vmatpush1.bf16.msra.mxu0 0
    %1191 = vmatprep.subr.bf16.mxu0 0
    %1192 = vmatpush1.bf16.msra.mxu0 0
    %1193 = vmatprep.subr.bf16.mxu0 0
    %1194 = vmatpush1.bf16.msra.mxu0 0
    %1195 = vmatprep.subr.bf16.mxu0 0
    %1196 = vmatpush1.bf16.msra.mxu0 0
    %1197 = vmatprep.subr.bf16.mxu0 0
    %1198 = vmatpush1.bf16.msra.mxu0 0
    %1199 = vmatprep.subr.bf16.mxu0 0
    %1200 = vmatpush1.bf16.msra.mxu0 0
    %1201 = vmatprep.mubr.bf16.mxu0 0
    %1202 = vmatmul.mubr.bf16.gmra.mrb[0].mxu0 %v1167
    %v1203 = vpop.f32.mrb[0].mxu0
    %v1204 = vadd.f32 0.0, %v1203
    %v1205 = vpop.f32.mrb[0].mxu0
    %v1206 = vpop.f32.mrb[0].mxu0
    %v1207 = vpop.f32.mrb[0].mxu0
    %1208 = vdwg.mxu0
    %v1209 = vadd.f32 %v1161, %v1204
    %v1210 = vxor.u32 %v1209, 2147483648
    %v1211 = vmul.f32 %v1210, 1.442695
    %v1212 = vpow.pop %v1211
    %v1213 = vadd.f32 %v1212, 1.0
    %v1214 = vrcp.pop %v1213
    %v1215 = vmul.f32 1.0, %v1214
    %v1216 = vtanh.pop %v1209
    %v1217 = vmul.f32 %v1215, %v1149
    %1219 = vrot.lane.b32.xlu0 %v1216, 32
    %v1220 = vpop.permute.xlu0 %1219
    %v1222 = vmul.f32 %v1215, %v1220
    %1224 = vrot.lane.b32.xlu0 %v1222, 32
    %v1225 = vpop.permute.xlu0 %1224
    %v1227 = vadd.f32 %v1217, %v1225
    %v1228 = vtanh.pop %v1227
    %1230 = vrot.lane.b32.xlu0 %v1228, 32
    %v1231 = vpop.permute.xlu0 %1230
    %v1233 = vmul.f32 %v1215, %v1231
    %1235 = vrot.lane.b32.xlu0 %v1233, 64
    %v1236 = vpop.permute.xlu0 %1235
    %1238 = vst.msk [vmem:[#allocation4 - $0x4] sm:$0x80] %vm1003, %v1236
    %v1239 = vld [vmem:[#allocation3 + $0x20] sm:$0xff]
    %v1240 = vpack.c.bf16 %v1233, %v1233
    %1242 = vrot.lane.b32.xlu0 %v1240, 64
    %v1243 = vpop.permute.xlu0 %1242
    %v1245 = vsel %vm207, %v1243, 0
    %1247 = vmatprep.subr.bf16.mxu0 0
    %1248 = vmatpush1.bf16.msra.mxu0 %v930
    %1249 = vmatprep.subr.bf16.mxu0 0
    %1250 = vmatpush1.bf16.msra.mxu0 %v931
    %1251 = vmatprep.subr.bf16.mxu0 0
    %1252 = vmatpush1.bf16.msra.mxu0 0
    %1253 = vmatprep.subr.bf16.mxu0 0
    %1254 = vmatpush1.bf16.msra.mxu0 0
    %1255 = vmatprep.subr.bf16.mxu0 0
    %1256 = vmatpush1.bf16.msra.mxu0 0
    %1257 = vmatprep.subr.bf16.mxu0 0
    %1258 = vmatpush1.bf16.msra.mxu0 0
    %1259 = vmatprep.subr.bf16.mxu0 0
    %1260 = vmatpush1.bf16.msra.mxu0 0
    %1261 = vmatprep.subr.bf16.mxu0 0
    %1262 = vmatpush1.bf16.msra.mxu0 0
    %1263 = vmatprep.subr.bf16.mxu0 0
    %1264 = vmatpush1.bf16.msra.mxu0 0
    %1265 = vmatprep.subr.bf16.mxu0 0
    %1266 = vmatpush1.bf16.msra.mxu0 0
    %1267 = vmatprep.subr.bf16.mxu0 0
    %1268 = vmatpush1.bf16.msra.mxu0 0
    %1269 = vmatprep.subr.bf16.mxu0 0
    %1270 = vmatpush1.bf16.msra.mxu0 0
    %1271 = vmatprep.subr.bf16.mxu0 0
    %1272 = vmatpush1.bf16.msra.mxu0 0
    %1273 = vmatprep.subr.bf16.mxu0 0
    %1274 = vmatpush1.bf16.msra.mxu0 0
    %1275 = vmatprep.subr.bf16.mxu0 0
    %1276 = vmatpush1.bf16.msra.mxu0 0
    %1277 = vmatprep.subr.bf16.mxu0 0
    %1278 = vmatpush1.bf16.msra.mxu0 0
    %1279 = vmatprep.mubr.bf16.mxu0 0
    %1280 = vmatmul.mubr.bf16.gmra.mrb[0].mxu0 %v1245
    %v1281 = vpop.f32.mrb[0].mxu0
    %v1282 = vadd.f32 0.0, %v1281
    %v1283 = vpop.f32.mrb[0].mxu0
    %v1284 = vpop.f32.mrb[0].mxu0
    %v1285 = vpop.f32.mrb[0].mxu0
    %1286 = vdwg.mxu0
    %v1287 = vadd.f32 %v1239, %v1282
    %v1288 = vxor.u32 %v1287, 2147483648
    %v1289 = vmul.f32 %v1288, 1.442695
    %v1290 = vpow.pop %v1289
    %v1291 = vadd.f32 %v1290, 1.0
    %v1292 = vrcp.pop %v1291
    %v1293 = vmul.f32 1.0, %v1292
    %v1294 = vtanh.pop %v1287
    %v1295 = vmul.f32 %v1293, %v1227
    %1297 = vrot.lane.b32.xlu0 %v1294, 32
    %v1298 = vpop.permute.xlu0 %1297
    %v1300 = vmul.f32 %v1293, %v1298
    %1302 = vrot.lane.b32.xlu0 %v1300, 32
    %v1303 = vpop.permute.xlu0 %1302
    %v1305 = vadd.f32 %v1295, %v1303
    %v1306 = vtanh.pop %v1305
    %1308 = vrot.lane.b32.xlu0 %v1306, 32
    %v1309 = vpop.permute.xlu0 %1308
    %v1311 = vmul.f32 %v1293, %v1309
    %1313 = vrot.lane.b32.xlu0 %v1311, 64
    %v1314 = vpop.permute.xlu0 %1313
    %1316 = vst.msk [vmem:[#allocation4 - $0x3] sm:$0x80] %vm1003, %v1314
    %v1317 = vld [vmem:[#allocation3 + $0x28] sm:$0xff]
    %v1318 = vpack.c.bf16 %v1311, %v1311
    %1320 = vrot.lane.b32.xlu0 %v1318, 64
    %v1321 = vpop.permute.xlu0 %1320
    %v1323 = vsel %vm207, %v1321, 0
    %1325 = vmatprep.subr.bf16.mxu0 0
    %1326 = vmatpush1.bf16.msra.mxu0 %v930
    %1327 = vmatprep.subr.bf16.mxu0 0
    %1328 = vmatpush1.bf16.msra.mxu0 %v931
    %1329 = vmatprep.subr.bf16.mxu0 0
    %1330 = vmatpush1.bf16.msra.mxu0 0
    %1331 = vmatprep.subr.bf16.mxu0 0
    %1332 = vmatpush1.bf16.msra.mxu0 0
    %1333 = vmatprep.subr.bf16.mxu0 0
    %1334 = vmatpush1.bf16.msra.mxu0 0
    %1335 = vmatprep.subr.bf16.mxu0 0
    %1336 = vmatpush1.bf16.msra.mxu0 0
    %1337 = vmatprep.subr.bf16.mxu0 0
    %1338 = vmatpush1.bf16.msra.mxu0 0
    %1339 = vmatprep.subr.bf16.mxu0 0
    %1340 = vmatpush1.bf16.msra.mxu0 0
    %1341 = vmatprep.subr.bf16.mxu0 0
    %1342 = vmatpush1.bf16.msra.mxu0 0
    %1343 = vmatprep.subr.bf16.mxu0 0
    %1344 = vmatpush1.bf16.msra.mxu0 0
    %1345 = vmatprep.subr.bf16.mxu0 0
    %1346 = vmatpush1.bf16.msra.mxu0 0
    %1347 = vmatprep.subr.bf16.mxu0 0
    %1348 = vmatpush1.bf16.msra.mxu0 0
    %1349 = vmatprep.subr.bf16.mxu0 0
    %1350 = vmatpush1.bf16.msra.mxu0 0
    %1351 = vmatprep.subr.bf16.mxu0 0
    %1352 = vmatpush1.bf16.msra.mxu0 0
    %1353 = vmatprep.subr.bf16.mxu0 0
    %1354 = vmatpush1.bf16.msra.mxu0 0
    %1355 = vmatprep.subr.bf16.mxu0 0
    %1356 = vmatpush1.bf16.msra.mxu0 0
    %1357 = vmatprep.mubr.bf16.mxu0 0
    %1358 = vmatmul.mubr.bf16.gmra.mrb[0].mxu0 %v1323
    %v1359 = vpop.f32.mrb[0].mxu0
    %v1360 = vadd.f32 0.0, %v1359
    %v1361 = vpop.f32.mrb[0].mxu0
    %v1362 = vpop.f32.mrb[0].mxu0
    %v1363 = vpop.f32.mrb[0].mxu0
    %1364 = vdwg.mxu0
    %v1365 = vadd.f32 %v1317, %v1360
    %v1366 = vxor.u32 %v1365, 2147483648
    %v1367 = vmul.f32 %v1366, 1.442695
    %v1368 = vpow.pop %v1367
    %v1369 = vadd.f32 %v1368, 1.0
    %v1370 = vrcp.pop %v1369
    %v1371 = vmul.f32 1.0, %v1370
    %v1372 = vtanh.pop %v1365
    %v1373 = vmul.f32 %v1371, %v1305
    %1375 = vrot.lane.b32.xlu0 %v1372, 32
    %v1376 = vpop.permute.xlu0 %1375
    %v1378 = vmul.f32 %v1371, %v1376
    %1380 = vrot.lane.b32.xlu0 %v1378, 32
    %v1381 = vpop.permute.xlu0 %1380
    %v1383 = vadd.f32 %v1373, %v1381
    %v1384 = vtanh.pop %v1383
    %1386 = vrot.lane.b32.xlu0 %v1384, 32
    %v1387 = vpop.permute.xlu0 %1386
    %v1389 = vmul.f32 %v1371, %v1387
    %1391 = vrot.lane.b32.xlu0 %v1389, 64
    %v1392 = vpop.permute.xlu0 %1391
    %1394 = vst.msk [vmem:[#allocation4 - $0x2] sm:$0x80] %vm1003, %v1392
    %s1395 = scalar_lea.vmem [#allocation14], 8
    %1396 = vst.msk [vmem:[%s1395] sm:$0xff] %vm207, %v1392
    %v1397 = vld [vmem:[#allocation4] sm:$0x3f]
    %v1398 = vld [vmem:[#allocation12] sm:$0x1]
    %v1400 = vlaneseq
    %v1401 = vshrl.u32 %v1400, 7
    %v1402 = vsub.s32 0, %v1401
    %v1403 = vrot.slane %v1398, %v1402
    %v1405 = vmul.f32 %v1397, %v1403
    %vm1406 = vcmask 259072
    %v1407 = vsel %vm1406, %v1405, 0.0
    %1408 = vadd.xlane.f32.xlu0 %v1407
    %v1409 = vpop.xlane.xlu0 %1408
    %v1410 = vld [vmem:[#allocation5] sm:$0x1]
    %v1412 = vlaneseq
    %v1413 = vshrl.u32 %v1412, 7
    %v1414 = vsub.s32 0, %v1413
    %v1415 = vrot.slane %v1410, %v1414
    %v1417 = vadd.f32 %v1409, %v1415
    %vm1418 = vcmask 5120
    %1419 = vst.msk [vmem:[%s9] sm:$0x3f] %vm1418, %v1417
    // Predicated region
    $region54: #{_fused_forward.1} parent=1 // pred_check
      _
    $region55: #{_fused_forward.1} parent=1 // pred_check_branch
      %1421 = sbr.rel (0) target = $region57
    $region56: #{_fused_forward.1} parent=1 // pred_region
      _
    $region57: #{_fused_forward.1} parent=1 // pred_fallthru
      _
    // Predicated region
    $region58: #{_fused_forward.1} parent=1 // pred_check
      _
    $region59: #{_fused_forward.1} parent=1 // pred_check_branch
      %1423 = sbr.rel (0) target = $region61
    $region60: #{_fused_forward.1} parent=1 // pred_region
      %s1425 = ssub.s32 256, 256
      %1426 = vsyncadd [#allocation8], %s1425
      %s1427 = sshll.u32 [#allocation14], 4
      %s1428 = int_to_ptr.vmem [resolvable:$true] %s1427
      %1433 = dma.vmem_to_hbm [thread:$0]  %s1428, 256, %s10, [#allocation8], 128, 128, 8
    $region61: #{_fused_forward.1} parent=1 // pred_fallthru
      _
    // Predicated region
    $region62: #{_fused_forward.1} parent=1 // pred_check
      _
    $region63: #{_fused_forward.1} parent=1 // pred_check_branch
      %1435 = sbr.rel (0) target = $region65
    $region64: #{_fused_forward.1} parent=1 // pred_region
      _
    $region65: #{_fused_forward.1} parent=1 // pred_fallthru
      _
    // Predicated region
    $region66: #{_fused_forward.1} parent=1 // pred_check
      _
    $region67: #{_fused_forward.1} parent=1 // pred_check_branch
      %1437 = sbr.rel (0) target = $region69
    $region68: #{_fused_forward.1} parent=1 // pred_region
      %1438 = dma.done [#allocation8], 256
    $region69: #{_fused_forward.1} parent=1 // pred_fallthru
      _
    %1439 = vsyncpa [#allocation7], 1
    %1440 = vsyncpa [#allocation10], 1
    %1441 = vsyncpa [#allocation13], 1
    %1442 = vsyncpa [#allocation8], 1

</llo_original>
